<compile_context>
chip_gen: v6e
topology: v6e:2x2x1
jax: 0.10.0
libtpu: 0.0.40
codegen_flags: <defaults>
</compile_context>

<pallas_src>
import functools

import jax
import jax.numpy as jnp
from jax.experimental import pallas as pl
from jax.experimental.pallas import tpu as pltpu

n_embd = 64
n_head = 4
head_size = n_embd // n_head  # 16
block_size = 32
LN_EPS = 1e-5


def _layer_norm(x, g, b):
    # x: (M, C); g, b: (1, C)
    mu = jnp.mean(x, axis=-1, keepdims=True)
    var = jnp.mean((x - mu) ** 2, axis=-1, keepdims=True)
    return (x - mu) * jax.lax.rsqrt(var + LN_EPS) * g + b


def block_kernel(x_ref,
                 ln1_g_ref, ln1_b_ref,
                 wqkv_ref, wproj_ref, bproj_ref,
                 ln2_g_ref, ln2_b_ref,
                 w1_ref, b1_ref, w2_ref, b2_ref,
                 out_ref, *, bb, seq):
    M, C = x_ref.shape                      # (BB*T, C) -- already flat (host reshape)
    H, hs = n_head, head_size
    x = x_ref[...].astype(jnp.float32)

    # ---- ln1 + fused QKV projection (attention scale folded into Wq) --------
    xn = _layer_norm(x, ln1_g_ref[...], ln1_b_ref[...])               # (M, C)
    qkv = jnp.dot(xn, wqkv_ref[...],
                  preferred_element_type=jnp.float32)                 # (M, 3C)

    # One relayout per operand: (M, C) -> (BB*H, T, hs) head-major batching.
    def to_heads(a):
        return (a.reshape(bb, seq, H, hs)
                 .transpose(0, 2, 1, 3)
                 .reshape(bb * H, seq, hs))

    qh = to_heads(qkv[:, :C])
    kh = to_heads(qkv[:, C:2 * C])
    vh = to_heads(qkv[:, 2 * C:])

    # ---- head-batched attention ---------------------------------------------
    # NOTE: no causal mask (the reference discards the masked_fill result).
    wei = jnp.einsum('gtd,gsd->gts', qh, kh,
                     preferred_element_type=jnp.float32)              # (G, T, T)
    wei = wei - jnp.max(wei, axis=-1, keepdims=True)
    p = jnp.exp(wei)
    p = p * pl.reciprocal(jnp.sum(p, axis=-1, keepdims=True), approx=True)
    oh = jnp.einsum('gts,gsd->gtd', p, vh,
                    preferred_element_type=jnp.float32)               # (G, T, hs)

    # Back to (M, C) once, then a single K=64 projection matmul.
    o = (oh.reshape(bb, H, seq, hs)
           .transpose(0, 2, 1, 3)
           .reshape(M, C))
    sa = jnp.dot(o, wproj_ref[...],
                 preferred_element_type=jnp.float32) + bproj_ref[...]  # (M, C)

    x1 = x + sa

    # ---- ln2 + feed-forward --------------------------------------------------
    xn2 = _layer_norm(x1, ln2_g_ref[...], ln2_b_ref[...])             # (M, C)
    h1 = jnp.dot(xn2, w1_ref[...],
                 preferred_element_type=jnp.float32) + b1_ref[...]    # (M, 4C)
    h1 = jnp.maximum(h1, 0.0)                                         # ReLU
    ff = jnp.dot(h1, w2_ref[...],
                 preferred_element_type=jnp.float32) + b2_ref[...]    # (M, C)

    out_ref[...] = (x1 + ff).astype(out_ref.dtype)


def block_forward(x, params, *, batch_block=256):
    B, T, C = x.shape
    assert C == n_embd and T <= block_size

    # Batch blocking: BB batch elements per grid step (pad B if needed).
    # Keep at least 2 grid steps when B > 1 so the "parallel" axis spans both
    # TensorCores on v7x.  Re-derive batch_block per generation if pushing BB
    # toward the v7x 64 MiB VMEM ceiling (BB*T <~ 8-10K rows).
    BB = max(1, min(batch_block, B))
    if B > 1 and BB >= B:
        BB = pl.cdiv(B, 2)
    Bp = pl.cdiv(B, BB) * BB
    xp = x if Bp == B else jnp.pad(x, ((0, Bp - B), (0, 0), (0, 0)))
    x2d = xp.reshape(Bp * T, C)          # host-side flatten is free in HBM

    # Fuse QKV weights; fold the attention scale (n_embd ** -0.5) into Wq.
    scale = float(n_embd) ** -0.5
    wqkv = jnp.concatenate(
        [params["wq"] * scale, params["wk"], params["wv"]], axis=1)   # (C, 3C)

    rows = BB * T

    def full(shape):
        return pl.BlockSpec(shape, lambda b, _n=len(shape): (0,) * _n)

    in_specs = [
        pl.BlockSpec((rows, C), lambda b: (b, 0)),         # x (flat 2-D)
        full((1, C)), full((1, C)),                        # ln1 gamma/beta
        full((C, 3 * C)),                                  # fused Wqkv
        full((C, C)), full((1, C)),                        # Wproj, bproj
        full((1, C)), full((1, C)),                        # ln2 gamma/beta
        full((C, 4 * C)), full((1, 4 * C)),                # W1, b1
        full((4 * C, C)), full((1, C)),                    # W2, b2
    ]
    out_spec = pl.BlockSpec((rows, C), lambda b: (b, 0))

    # Advisory cost estimate for XLA scheduling around the custom call.
    mm_flops_per_row = (2 * C * (3 * C) + 2 * C * C
                        + 2 * C * (4 * C) + 2 * (4 * C) * C)
    attn_flops = Bp * n_head * (2 * T * T * head_size) * 2
    cost = pl.CostEstimate(
        flops=int(Bp * T * mm_flops_per_row + attn_flops),
        transcendentals=int(Bp * n_head * T * T),
        bytes_accessed=int(2 * Bp * T * C * 4
                           + 4 * (wqkv.size + params["wproj"].size
                                  + params["w1"].size + params["w2"].size)),
    )

    kernel = functools.partial(block_kernel, bb=BB, seq=T)
    out2d = pl.pallas_call(
        kernel,
        out_shape=jax.ShapeDtypeStruct((Bp * T, C), x.dtype),
        grid_spec=pltpu.PrefetchScalarGridSpec(
            num_scalar_prefetch=0,
            grid=(Bp // BB,),
            in_specs=in_specs,
            out_specs=out_spec,
        ),
        compiler_params=pltpu.CompilerParams(
            dimension_semantics=("parallel",),
            vmem_limit_bytes=64 * 1024 * 1024),
        cost_estimate=cost,
    )(x2d,
      params["ln1_g"], params["ln1_b"],
      wqkv, params["wproj"], params["bproj"],
      params["ln2_g"], params["ln2_b"],
      params["w1"], params["b1"], params["w2"], params["b2"])

    out = out2d.reshape(Bp, T, C)
    return out if Bp == B else out[:B]


# ---------------------------- pure-JAX reference -------------------------------
def block_reference(x, p):
    def ln(y, g, b):
        mu = y.mean(-1, keepdims=True)
        var = ((y - mu) ** 2).mean(-1, keepdims=True)
        return (y - mu) / jnp.sqrt(var + LN_EPS) * g[0] + b[0]

    def one(xb):  # (T, C)
        xn = ln(xb, p["ln1_g"], p["ln1_b"])
        q, k, v = xn @ p["wq"], xn @ p["wk"], xn @ p["wv"]
        outs = []
        for h in range(n_head):
            lo, hi = h * head_size, (h + 1) * head_size
            wei = (q[:, lo:hi] @ k[:, lo:hi].T) * (n_embd ** -0.5)
            wei = jax.nn.softmax(wei, axis=-1)
            outs.append(wei @ v[:, lo:hi])
        sa = jnp.concatenate(outs, -1) @ p["wproj"] + p["bproj"][0]
        x1 = xb + sa
        xn2 = ln(x1, p["ln2_g"], p["ln2_b"])
        ff = jnp.maximum(xn2 @ p["w1"] + p["b1"][0], 0.0) @ p["w2"] + p["b2"][0]
        return x1 + ff

    return jax.vmap(one)(x)


def init_params(key):
    ks = jax.random.split(key, 8)
    C = n_embd
    return {
        "ln1_g": jnp.ones((1, C), jnp.float32),
        "ln1_b": jnp.zeros((1, C), jnp.float32),
        "ln2_g": jnp.ones((1, C), jnp.float32),
        "ln2_b": jnp.zeros((1, C), jnp.float32),
        # Linear weights stored (in, out) == PyTorch weight.T
        "wq": jax.random.normal(ks[0], (C, C), jnp.float32) * 0.02,
        "wk": jax.random.normal(ks[1], (C, C), jnp.float32) * 0.02,
        "wv": jax.random.normal(ks[2], (C, C), jnp.float32) * 0.02,
        "wproj": jax.random.normal(ks[3], (C, C), jnp.float32) * 0.02,
        "bproj": jax.random.normal(ks[4], (1, C), jnp.float32) * 0.02,
        "w1": jax.random.normal(ks[5], (C, 4 * C), jnp.float32) * 0.02,
        "b1": jnp.zeros((1, 4 * C), jnp.float32),
        "w2": jax.random.normal(ks[6], (4 * C, C), jnp.float32) * 0.02,
        "b2": jnp.zeros((1, C), jnp.float32),
    }


if __name__ == "__main__":
    key = jax.random.PRNGKey(0)
    k_x, k_p = jax.random.split(key)

    B, T = 2, 8  # T <= block_size
    x = jax.random.normal(k_x, (B, T, n_embd), jnp.float32)
    params = init_params(k_p)

    out = jax.block_until_ready(block_forward(x, params))
    ref = block_reference(x, params)
    assert out.shape == (B, T, n_embd)
    assert jnp.allclose(out, ref, atol=1e-4, rtol=1e-4), (
        float(jnp.max(jnp.abs(out - ref))))

    # Exercise the batch-padding / multi-step-grid path.
    B2 = 5
    x2 = jax.random.normal(jax.random.PRNGKey(1), (B2, T, n_embd), jnp.float32)
    out2 = jax.block_until_ready(block_forward(x2, params, batch_block=2))
    ref2 = block_reference(x2, params)
    assert out2.shape == (B2, T, n_embd)
    assert jnp.allclose(out2, ref2, atol=1e-4, rtol=1e-4), (
        float(jnp.max(jnp.abs(out2 - ref2))))

    print("KERNEL_OK")
</pallas_src>

<mosaic_0001>
module attributes {stable_mosaic.version = 11 : i64} {
  func.func @block_kernel(%arg0: i32, %arg1: memref<8x64xf32, #tpu.memory_space<vmem>>, %arg2: memref<1x64xf32, #tpu.memory_space<vmem>>, %arg3: memref<1x64xf32, #tpu.memory_space<vmem>>, %arg4: memref<64x192xf32, #tpu.memory_space<vmem>>, %arg5: memref<64x64xf32, #tpu.memory_space<vmem>>, %arg6: memref<1x64xf32, #tpu.memory_space<vmem>>, %arg7: memref<1x64xf32, #tpu.memory_space<vmem>>, %arg8: memref<1x64xf32, #tpu.memory_space<vmem>>, %arg9: memref<64x256xf32, #tpu.memory_space<vmem>>, %arg10: memref<1x256xf32, #tpu.memory_space<vmem>>, %arg11: memref<256x64xf32, #tpu.memory_space<vmem>>, %arg12: memref<1x64xf32, #tpu.memory_space<vmem>>, %arg13: memref<8x64xf32, #tpu.memory_space<vmem>>) attributes {dimension_semantics = [#tpu.dimension_semantics<parallel>], iteration_bounds = array<i64: 2>, scalar_prefetch = 0 : i64, scratch_operands = 0 : i64, tpu.core_type = #tpu.core_type<tc>, window_params = [{transform_indices = @transform_0, window_bounds = array<i64: 8, 64>}, {pipeline_mode = #tpu.pipeline_mode<synchronous>, transform_indices = @transform_1, window_bounds = array<i64: 1, 64>}, {pipeline_mode = #tpu.pipeline_mode<synchronous>, transform_indices = @transform_2, window_bounds = array<i64: 1, 64>}, {pipeline_mode = #tpu.pipeline_mode<synchronous>, transform_indices = @transform_3, window_bounds = array<i64: 64, 192>}, {pipeline_mode = #tpu.pipeline_mode<synchronous>, transform_indices = @transform_4, window_bounds = array<i64: 64, 64>}, {pipeline_mode = #tpu.pipeline_mode<synchronous>, transform_indices = @transform_5, window_bounds = array<i64: 1, 64>}, {pipeline_mode = #tpu.pipeline_mode<synchronous>, transform_indices = @transform_6, window_bounds = array<i64: 1, 64>}, {pipeline_mode = #tpu.pipeline_mode<synchronous>, transform_indices = @transform_7, window_bounds = array<i64: 1, 64>}, {pipeline_mode = #tpu.pipeline_mode<synchronous>, transform_indices = @transform_8, window_bounds = array<i64: 64, 256>}, {pipeline_mode = #tpu.pipeline_mode<synchronous>, transform_indices = @transform_9, window_bounds = array<i64: 1, 256>}, {pipeline_mode = #tpu.pipeline_mode<synchronous>, transform_indices = @transform_10, window_bounds = array<i64: 256, 64>}, {pipeline_mode = #tpu.pipeline_mode<synchronous>, transform_indices = @transform_11, window_bounds = array<i64: 1, 64>}, {transform_indices = @transform_12, window_bounds = array<i64: 8, 64>}]} {
    %c0 = arith.constant 0 : index
    %c0_0 = arith.constant 0 : index
    %0 = vector.load %arg1[%c0, %c0_0] : memref<8x64xf32, #tpu.memory_space<vmem>>, vector<8x64xf32>
    %c0_1 = arith.constant 0 : index
    %c0_2 = arith.constant 0 : index
    %1 = vector.load %arg2[%c0_1, %c0_2] : memref<1x64xf32, #tpu.memory_space<vmem>>, vector<1x64xf32>
    %c0_3 = arith.constant 0 : index
    %c0_4 = arith.constant 0 : index
    %2 = vector.load %arg3[%c0_3, %c0_4] : memref<1x64xf32, #tpu.memory_space<vmem>>, vector<1x64xf32>
    %cst = arith.constant dense<0.000000e+00> : vector<8xf32>
    %3 = vector.multi_reduction <add>, %0, %cst [1] : vector<8x64xf32> to vector<8xf32>
    %4 = vector.shape_cast %3 : vector<8xf32> to vector<8x1xf32>
    %cst_5 = arith.constant 6.400000e+01 : f32
    %5 = vector.broadcast %cst_5 : f32 to vector<8x1xf32>
    %6 = arith.divf %4, %5 : vector<8x1xf32>
    %7 = vector.broadcast %6 : vector<8x1xf32> to vector<8x64xf32>
    %8 = arith.subf %0, %7 : vector<8x64xf32>
    %9 = arith.mulf %8, %8 : vector<8x64xf32>
    %cst_6 = arith.constant dense<0.000000e+00> : vector<8xf32>
    %10 = vector.multi_reduction <add>, %9, %cst_6 [1] : vector<8x64xf32> to vector<8xf32>
    %11 = vector.shape_cast %10 : vector<8xf32> to vector<8x1xf32>
    %cst_7 = arith.constant 6.400000e+01 : f32
    %12 = vector.broadcast %cst_7 : f32 to vector<8x1xf32>
    %13 = arith.divf %11, %12 : vector<8x1xf32>
    %14 = vector.broadcast %6 : vector<8x1xf32> to vector<8x64xf32>
    %15 = arith.subf %0, %14 : vector<8x64xf32>
    %cst_8 = arith.constant 9.99999974E-6 : f32
    %16 = vector.broadcast %cst_8 : f32 to vector<8x1xf32>
    %17 = arith.addf %13, %16 : vector<8x1xf32>
    %18 = math.rsqrt %17 : vector<8x1xf32>
    %19 = vector.broadcast %18 : vector<8x1xf32> to vector<8x64xf32>
    %20 = arith.mulf %15, %19 : vector<8x64xf32>
    %21 = vector.broadcast %1 : vector<1x64xf32> to vector<8x64xf32>
    %22 = arith.mulf %20, %21 : vector<8x64xf32>
    %23 = vector.broadcast %2 : vector<1x64xf32> to vector<8x64xf32>
    %24 = arith.addf %22, %23 : vector<8x64xf32>
    %c0_9 = arith.constant 0 : index
    %c0_10 = arith.constant 0 : index
    %25 = vector.load %arg4[%c0_9, %c0_10] : memref<64x192xf32, #tpu.memory_space<vmem>>, vector<64x192xf32>
    %cst_11 = arith.constant dense<0.000000e+00> : vector<8x192xf32>
    %26 = tpu.matmul %24, %25, %cst_11 {dimension_numbers = #tpu.dot_dimension_numbers<[1], [0], [0], [1], [0, 0, 1, 1], [], []>} : vector<8x64xf32>, vector<64x192xf32>, vector<8x192xf32> -> vector<8x192xf32>
    %27 = vector.extract_strided_slice %26 {offsets = [0, 0], sizes = [8, 64], strides = [1, 1]} : vector<8x192xf32> to vector<8x64xf32>
    %28 = vector.shape_cast %27 : vector<8x64xf32> to vector<1x8x4x16xf32>
    %29 = tpu.transpose %28, [0, 2, 1, 3] : vector<1x8x4x16xf32> -> vector<1x4x8x16xf32>
    %30 = vector.shape_cast %29 : vector<1x4x8x16xf32> to vector<4x8x16xf32>
    %31 = vector.extract_strided_slice %26 {offsets = [0, 64], sizes = [8, 64], strides = [1, 1]} : vector<8x192xf32> to vector<8x64xf32>
    %32 = vector.shape_cast %31 : vector<8x64xf32> to vector<1x8x4x16xf32>
    %33 = tpu.transpose %32, [0, 2, 1, 3] : vector<1x8x4x16xf32> -> vector<1x4x8x16xf32>
    %34 = vector.shape_cast %33 : vector<1x4x8x16xf32> to vector<4x8x16xf32>
    %35 = vector.extract_strided_slice %26 {offsets = [0, 128], sizes = [8, 64], strides = [1, 1]} : vector<8x192xf32> to vector<8x64xf32>
    %36 = vector.shape_cast %35 : vector<8x64xf32> to vector<1x8x4x16xf32>
    %37 = tpu.transpose %36, [0, 2, 1, 3] : vector<1x8x4x16xf32> -> vector<1x4x8x16xf32>
    %38 = vector.shape_cast %37 : vector<1x4x8x16xf32> to vector<4x8x16xf32>
    "tpu.trace_start"() <{level = 10 : i32, message = "gtd,gsd->gts"}> : () -> ()
    %cst_12 = arith.constant dense<0.000000e+00> : vector<4x8x8xf32>
    %39 = tpu.matmul %30, %34, %cst_12 {dimension_numbers = #tpu.dot_dimension_numbers<[2], [2], [1], [1], [0, 0, 0, 1, 1, 1], [0], [0]>} : vector<4x8x16xf32>, vector<4x8x16xf32>, vector<4x8x8xf32> -> vector<4x8x8xf32>
    "tpu.trace_stop"() : () -> ()
    %cst_13 = arith.constant dense<0xFF800000> : vector<4x8xf32>
    %40 = vector.multi_reduction <maximumf>, %39, %cst_13 [2] : vector<4x8x8xf32> to vector<4x8xf32>
    %41 = vector.shape_cast %40 : vector<4x8xf32> to vector<4x8x1xf32>
    %42 = vector.broadcast %41 : vector<4x8x1xf32> to vector<4x8x8xf32>
    %43 = arith.subf %39, %42 : vector<4x8x8xf32>
    %44 = math.exp %43 : vector<4x8x8xf32>
    %cst_14 = arith.constant dense<0.000000e+00> : vector<4x8xf32>
    %45 = vector.multi_reduction <add>, %44, %cst_14 [2] : vector<4x8x8xf32> to vector<4x8xf32>
    %46 = vector.shape_cast %45 : vector<4x8xf32> to vector<4x8x1xf32>
    %47 = tpu.reciprocal %46 {approx = true} : vector<4x8x1xf32> -> vector<4x8x1xf32>
    %48 = vector.broadcast %47 : vector<4x8x1xf32> to vector<4x8x8xf32>
    %49 = arith.mulf %44, %48 : vector<4x8x8xf32>
    "tpu.trace_start"() <{level = 10 : i32, message = "gts,gsd->gtd"}> : () -> ()
    %cst_15 = arith.constant dense<0.000000e+00> : vector<4x8x16xf32>
    %50 = tpu.matmul %49, %38, %cst_15 {dimension_numbers = #tpu.dot_dimension_numbers<[2], [1], [1], [2], [0, 0, 0, 1, 1, 2], [0], [0]>} : vector<4x8x8xf32>, vector<4x8x16xf32>, vector<4x8x16xf32> -> vector<4x8x16xf32>
    "tpu.trace_stop"() : () -> ()
    %51 = vector.shape_cast %50 : vector<4x8x16xf32> to vector<1x4x8x16xf32>
    %52 = tpu.transpose %51, [0, 2, 1, 3] : vector<1x4x8x16xf32> -> vector<1x8x4x16xf32>
    %53 = vector.shape_cast %52 : vector<1x8x4x16xf32> to vector<8x64xf32>
    %c0_16 = arith.constant 0 : index
    %c0_17 = arith.constant 0 : index
    %54 = vector.load %arg5[%c0_16, %c0_17] : memref<64x64xf32, #tpu.memory_space<vmem>>, vector<64x64xf32>
    %cst_18 = arith.constant dense<0.000000e+00> : vector<8x64xf32>
    %55 = tpu.matmul %53, %54, %cst_18 {dimension_numbers = #tpu.dot_dimension_numbers<[1], [0], [0], [1], [0, 0, 1, 1], [], []>} : vector<8x64xf32>, vector<64x64xf32>, vector<8x64xf32> -> vector<8x64xf32>
    %c0_19 = arith.constant 0 : index
    %c0_20 = arith.constant 0 : index
    %56 = vector.load %arg6[%c0_19, %c0_20] : memref<1x64xf32, #tpu.memory_space<vmem>>, vector<1x64xf32>
    %57 = vector.broadcast %56 : vector<1x64xf32> to vector<8x64xf32>
    %58 = arith.addf %55, %57 : vector<8x64xf32>
    %59 = arith.addf %0, %58 : vector<8x64xf32>
    %c0_21 = arith.constant 0 : index
    %c0_22 = arith.constant 0 : index
    %60 = vector.load %arg7[%c0_21, %c0_22] : memref<1x64xf32, #tpu.memory_space<vmem>>, vector<1x64xf32>
    %c0_23 = arith.constant 0 : index
    %c0_24 = arith.constant 0 : index
    %61 = vector.load %arg8[%c0_23, %c0_24] : memref<1x64xf32, #tpu.memory_space<vmem>>, vector<1x64xf32>
    %cst_25 = arith.constant dense<0.000000e+00> : vector<8xf32>
    %62 = vector.multi_reduction <add>, %59, %cst_25 [1] : vector<8x64xf32> to vector<8xf32>
    %63 = vector.shape_cast %62 : vector<8xf32> to vector<8x1xf32>
    %cst_26 = arith.constant 6.400000e+01 : f32
    %64 = vector.broadcast %cst_26 : f32 to vector<8x1xf32>
    %65 = arith.divf %63, %64 : vector<8x1xf32>
    %66 = vector.broadcast %65 : vector<8x1xf32> to vector<8x64xf32>
    %67 = arith.subf %59, %66 : vector<8x64xf32>
    %68 = arith.mulf %67, %67 : vector<8x64xf32>
    %cst_27 = arith.constant dense<0.000000e+00> : vector<8xf32>
    %69 = vector.multi_reduction <add>, %68, %cst_27 [1] : vector<8x64xf32> to vector<8xf32>
    %70 = vector.shape_cast %69 : vector<8xf32> to vector<8x1xf32>
    %cst_28 = arith.constant 6.400000e+01 : f32
    %71 = vector.broadcast %cst_28 : f32 to vector<8x1xf32>
    %72 = arith.divf %70, %71 : vector<8x1xf32>
    %73 = vector.broadcast %65 : vector<8x1xf32> to vector<8x64xf32>
    %74 = arith.subf %59, %73 : vector<8x64xf32>
    %cst_29 = arith.constant 9.99999974E-6 : f32
    %75 = vector.broadcast %cst_29 : f32 to vector<8x1xf32>
    %76 = arith.addf %72, %75 : vector<8x1xf32>
    %77 = math.rsqrt %76 : vector<8x1xf32>
    %78 = vector.broadcast %77 : vector<8x1xf32> to vector<8x64xf32>
    %79 = arith.mulf %74, %78 : vector<8x64xf32>
    %80 = vector.broadcast %60 : vector<1x64xf32> to vector<8x64xf32>
    %81 = arith.mulf %79, %80 : vector<8x64xf32>
    %82 = vector.broadcast %61 : vector<1x64xf32> to vector<8x64xf32>
    %83 = arith.addf %81, %82 : vector<8x64xf32>
    %c0_30 = arith.constant 0 : index
    %c0_31 = arith.constant 0 : index
    %84 = vector.load %arg9[%c0_30, %c0_31] : memref<64x256xf32, #tpu.memory_space<vmem>>, vector<64x256xf32>
    %cst_32 = arith.constant dense<0.000000e+00> : vector<8x256xf32>
    %85 = tpu.matmul %83, %84, %cst_32 {dimension_numbers = #tpu.dot_dimension_numbers<[1], [0], [0], [1], [0, 0, 1, 1], [], []>} : vector<8x64xf32>, vector<64x256xf32>, vector<8x256xf32> -> vector<8x256xf32>
    %c0_33 = arith.constant 0 : index
    %c0_34 = arith.constant 0 : index
    %86 = vector.load %arg10[%c0_33, %c0_34] : memref<1x256xf32, #tpu.memory_space<vmem>>, vector<1x256xf32>
    %87 = vector.broadcast %86 : vector<1x256xf32> to vector<8x256xf32>
    %88 = arith.addf %85, %87 : vector<8x256xf32>
    %cst_35 = arith.constant 0.000000e+00 : f32
    %89 = vector.broadcast %cst_35 : f32 to vector<8x256xf32>
    %90 = arith.maximumf %88, %89 : vector<8x256xf32>
    %c0_36 = arith.constant 0 : index
    %c0_37 = arith.constant 0 : index
    %91 = vector.load %arg11[%c0_36, %c0_37] : memref<256x64xf32, #tpu.memory_space<vmem>>, vector<256x64xf32>
    %cst_38 = arith.constant dense<0.000000e+00> : vector<8x64xf32>
    %92 = tpu.matmul %90, %91, %cst_38 {dimension_numbers = #tpu.dot_dimension_numbers<[1], [0], [0], [1], [0, 0, 1, 1], [], []>} : vector<8x256xf32>, vector<256x64xf32>, vector<8x64xf32> -> vector<8x64xf32>
    %c0_39 = arith.constant 0 : index
    %c0_40 = arith.constant 0 : index
    %93 = vector.load %arg12[%c0_39, %c0_40] : memref<1x64xf32, #tpu.memory_space<vmem>>, vector<1x64xf32>
    %94 = vector.broadcast %93 : vector<1x64xf32> to vector<8x64xf32>
    %95 = arith.addf %92, %94 : vector<8x64xf32>
    %96 = arith.addf %59, %95 : vector<8x64xf32>
    %c0_41 = arith.constant 0 : index
    %c0_42 = arith.constant 0 : index
    %97 = vector.load %arg13[%c0_41, %c0_42] : memref<8x64xf32, #tpu.memory_space<vmem>>, vector<8x64xf32>
    tpu.vector_store %arg13[%c0_41, %c0_42], %96 {strides = array<i32>} : memref<8x64xf32, #tpu.memory_space<vmem>>, vector<8x64xf32>,
    return
  }
  func.func @transform_0(%arg0: i32) -> (i32, i32) {
    %c0_i32 = arith.constant 0 : i32
    %c0_i32_0 = arith.constant 0 : i32
    return %arg0, %c0_i32 : i32, i32
  }
  func.func @transform_1(%arg0: i32) -> (i32, i32) {
    %c0_i32 = arith.constant 0 : i32
    %c0_i32_0 = arith.constant 0 : i32
    %c0_i32_1 = arith.constant 0 : i32
    return %c0_i32, %c0_i32_0 : i32, i32
  }
  func.func @transform_2(%arg0: i32) -> (i32, i32) {
    %c0_i32 = arith.constant 0 : i32
    %c0_i32_0 = arith.constant 0 : i32
    %c0_i32_1 = arith.constant 0 : i32
    return %c0_i32, %c0_i32_0 : i32, i32
  }
  func.func @transform_3(%arg0: i32) -> (i32, i32) {
    %c0_i32 = arith.constant 0 : i32
    %c0_i32_0 = arith.constant 0 : i32
    %c0_i32_1 = arith.constant 0 : i32
    return %c0_i32, %c0_i32_0 : i32, i32
  }
  func.func @transform_4(%arg0: i32) -> (i32, i32) {
    %c0_i32 = arith.constant 0 : i32
    %c0_i32_0 = arith.constant 0 : i32
    %c0_i32_1 = arith.constant 0 : i32
    return %c0_i32, %c0_i32_0 : i32, i32
  }
  func.func @transform_5(%arg0: i32) -> (i32, i32) {
    %c0_i32 = arith.constant 0 : i32
    %c0_i32_0 = arith.constant 0 : i32
    %c0_i32_1 = arith.constant 0 : i32
    return %c0_i32, %c0_i32_0 : i32, i32
  }
  func.func @transform_6(%arg0: i32) -> (i32, i32) {
    %c0_i32 = arith.constant 0 : i32
    %c0_i32_0 = arith.constant 0 : i32
    %c0_i32_1 = arith.constant 0 : i32
    return %c0_i32, %c0_i32_0 : i32, i32
  }
  func.func @transform_7(%arg0: i32) -> (i32, i32) {
    %c0_i32 = arith.constant 0 : i32
    %c0_i32_0 = arith.constant 0 : i32
    %c0_i32_1 = arith.constant 0 : i32
    return %c0_i32, %c0_i32_0 : i32, i32
  }
  func.func @transform_8(%arg0: i32) -> (i32, i32) {
    %c0_i32 = arith.constant 0 : i32
    %c0_i32_0 = arith.constant 0 : i32
    %c0_i32_1 = arith.constant 0 : i32
    return %c0_i32, %c0_i32_0 : i32, i32
  }
  func.func @transform_9(%arg0: i32) -> (i32, i32) {
    %c0_i32 = arith.constant 0 : i32
    %c0_i32_0 = arith.constant 0 : i32
    %c0_i32_1 = arith.constant 0 : i32
    return %c0_i32, %c0_i32_0 : i32, i32
  }
  func.func @transform_10(%arg0: i32) -> (i32, i32) {
    %c0_i32 = arith.constant 0 : i32
    %c0_i32_0 = arith.constant 0 : i32
    %c0_i32_1 = arith.constant 0 : i32
    return %c0_i32, %c0_i32_0 : i32, i32
  }
  func.func @transform_11(%arg0: i32) -> (i32, i32) {
    %c0_i32 = arith.constant 0 : i32
    %c0_i32_0 = arith.constant 0 : i32
    %c0_i32_1 = arith.constant 0 : i32
    return %c0_i32, %c0_i32_0 : i32, i32
  }
  func.func @transform_12(%arg0: i32) -> (i32, i32) {
    %c0_i32 = arith.constant 0 : i32
    %c0_i32_0 = arith.constant 0 : i32
    return %arg0, %c0_i32 : i32, i32
  }
}

</mosaic_0001>

<llo_original>
// kernel: tpu_custom_call.1
$region0: #{tpu_custom_call.1}
  #allocation0 [shape = 'u32[]', space=smem, size = 0x4, offset = 0x4, fixed_abs, tag = 'smem constant byte address 0x4 - core index']
  #allocation1 [shape = 'u32[144,128]{1,0:T(1,128)}', space=vmem, size = 0x12000, scoped, tag = 'internal scratch']
  %s0 = inlined_call_operand.vmem [shape: f32[16,64], index: 0, kind: input, shape index: {}]
  %s1 = inlined_call_operand.vmem [shape: f32[1,64], index: 1, kind: input, shape index: {}]
  %s2 = inlined_call_operand.vmem [shape: f32[1,64], index: 2, kind: input, shape index: {}]
  %s3 = inlined_call_operand.vmem [shape: f32[64,192], index: 3, kind: input, shape index: {}]
  %s4 = inlined_call_operand.vmem [shape: f32[64,64], index: 4, kind: input, shape index: {}]
  %s5 = inlined_call_operand.vmem [shape: f32[1,64], index: 5, kind: input, shape index: {}]
  %s6 = inlined_call_operand.vmem [shape: f32[1,64], index: 6, kind: input, shape index: {}]
  %s7 = inlined_call_operand.vmem [shape: f32[1,64], index: 7, kind: input, shape index: {}]
  %s8 = inlined_call_operand.vmem [shape: f32[64,256], index: 8, kind: input, shape index: {}]
  %s9 = inlined_call_operand.vmem [shape: f32[1,256], index: 9, kind: input, shape index: {}]
  %s10 = inlined_call_operand.vmem [shape: f32[256,64], index: 10, kind: input, shape index: {}]
  %s11 = inlined_call_operand.vmem [shape: f32[1,64], index: 11, kind: input, shape index: {}]
  %s12 = inlined_call_operand.hbm [shape: f32[16,64], index: 12, kind: output, shape index: {}]
  %s13 = sld [smem:[#allocation0]]
  $region81: #{tpu_custom_call.1} parent=0
    _
  %s15 = ssub.s32 1, %s13
  %s16 = scalar_select 0, %s15, %s13
  $region1: #{tpu_custom_call.1} parent=0
    #allocation2 [shape = 'u8[8192]{0}', space=vmem, size = 0x2000, scoped, tag = 'output window, operand 0']
    #allocation3 [shape = 's32[2]{0}', space=sflag, size = 0x8, scoped, tag = 'scoped memory for tpu_custom_call.1']
    %17 = vsyncpa [#allocation3], 0
    %s18 = scalar_lea.sflag [#allocation3], 1
    %19 = vsyncpa %s18, 0
    loop: start=0, step=1, limit=4
    $region2: #{tpu_custom_call.1} parent=1 // loop_pre_header
      _
    $region3: #{tpu_custom_call.1} parent=1 // loop_header
      %s21 = sphi 0, %s25
      %p22 = scmp.ge.s32.totalorder %s21, 4
      %s31 = sphi 0, %s33
      %s34 = sphi 0, %s31
      %s35 = sphi 0, %s34
      %s51 = sphi 0, %s35
      %s55 = sphi 0, %s55
      %s57 = sphi 0, %s55
      %s58 = sphi 0, %s57
      %s72 = sphi 0, %s58
      %s76 = sphi 0, %s76
      %s78 = sphi 0, %s76
      %s79 = sphi 0, %s78
      %s93 = sphi 0, %s79
      %s97 = sphi 0, %s97
      %s99 = sphi 0, %s97
      %s100 = sphi 0, %s99
      %s114 = sphi 0, %s100
      %s118 = sphi 0, %s118
      %s120 = sphi 0, %s118
      %s121 = sphi 0, %s120
      %s135 = sphi 0, %s121
      %s139 = sphi 0, %s139
      %s141 = sphi 0, %s139
      %s142 = sphi 0, %s141
      %s156 = sphi 0, %s142
      %s160 = sphi 0, %s160
      %s162 = sphi 0, %s160
      %s163 = sphi 0, %s162
      %s177 = sphi 0, %s163
      %s181 = sphi 0, %s181
      %s183 = sphi 0, %s181
      %s184 = sphi 0, %s183
      %s198 = sphi 0, %s184
      %s202 = sphi 0, %s202
      %s204 = sphi 0, %s202
      %s205 = sphi 0, %s204
      %s219 = sphi 0, %s205
      %s223 = sphi 0, %s223
      %s225 = sphi 0, %s223
      %s226 = sphi 0, %s225
      %s240 = sphi 0, %s226
      %s244 = sphi 0, %s244
      %s246 = sphi 0, %s244
      %s247 = sphi 0, %s246
      %s261 = sphi 0, %s247
      %s265 = sphi 0, %s265
      %s267 = sphi 0, %s265
      %s268 = sphi 0, %s267
      %s282 = sphi 0, %s268
      %s288 = sphi 0, %s290
      %s291 = sphi 0, %s288
      %s292 = sphi 0, %s291
      %s308 = sphi 0, %s292
    $region4: #{tpu_custom_call.1} parent=1 // loop_header_branch
      %24 = sbr.rel (%p22) target = $region8
    $region5: #{tpu_custom_call.1} parent=1 // loop_body
      %s26 = ssub.s32 %s21, 1
      %s27 = ssub.s32 %s21, 2
      %s28 = sadd.s32 %s21, 1
      %s29 = ssub.s32 %s21, %s28
      %p30 = scmp.eq.s32.totalorder %s29, 0
      %s32 = sadd.s32 %s31, 1
      %s33 = scalar_select %p30, %s31, %s32
      %p36 = pneg %p30
      %p37 = scmp.eq.s32.totalorder %s21, 1
      %p38 = por %p36, %p37
      %p39 = scmp.ne.s32.totalorder %s31, %s34
      %p40 = scmp.eq.s32.totalorder %s21, 0
      %p41 = por %p39, %p40
      %p42 = scmp.ne.s32.totalorder %s31, %s34
      %p43 = scmp.eq.s32.totalorder %s26, 1
      %p44 = por %p42, %p43
      %p45 = scmp.ne.s32.totalorder %s34, %s35
      %p46 = scmp.eq.s32.totalorder %s26, 0
      %p47 = por %p45, %p46
      %p48 = scmp.ne.s32.totalorder %s34, %s35
      %p49 = scmp.eq.s32.totalorder %s27, 1
      %p50 = por %p48, %p49
      %p52 = scmp.ne.s32.totalorder %s35, %s51
      %p53 = scmp.eq.s32.totalorder %s27, 0
      %p54 = por %p52, %p53
      %s56 = sadd.s32 %s55, 1
      %p59 = scmp.eq.s32.totalorder %s21, 1
      %p60 = scmp.ne.s32.totalorder %s55, %s57
      %p61 = scmp.eq.s32.totalorder %s21, 0
      %p62 = por %p60, %p61
      %p63 = scmp.ne.s32.totalorder %s55, %s57
      %p64 = scmp.eq.s32.totalorder %s26, 1
      %p65 = por %p63, %p64
      %p66 = scmp.ne.s32.totalorder %s57, %s58
      %p67 = scmp.eq.s32.totalorder %s26, 0
      %p68 = por %p66, %p67
      %p69 = scmp.ne.s32.totalorder %s57, %s58
      %p70 = scmp.eq.s32.totalorder %s27, 1
      %p71 = por %p69, %p70
      %p73 = scmp.ne.s32.totalorder %s58, %s72
      %p74 = scmp.eq.s32.totalorder %s27, 0
      %p75 = por %p73, %p74
      %s77 = sadd.s32 %s76, 1
      %p80 = scmp.eq.s32.totalorder %s21, 1
      %p81 = scmp.ne.s32.totalorder %s76, %s78
      %p82 = scmp.eq.s32.totalorder %s21, 0
      %p83 = por %p81, %p82
      %p84 = scmp.ne.s32.totalorder %s76, %s78
      %p85 = scmp.eq.s32.totalorder %s26, 1
      %p86 = por %p84, %p85
      %p87 = scmp.ne.s32.totalorder %s78, %s79
      %p88 = scmp.eq.s32.totalorder %s26, 0
      %p89 = por %p87, %p88
      %p90 = scmp.ne.s32.totalorder %s78, %s79
      %p91 = scmp.eq.s32.totalorder %s27, 1
      %p92 = por %p90, %p91
      %p94 = scmp.ne.s32.totalorder %s79, %s93
      %p95 = scmp.eq.s32.totalorder %s27, 0
      %p96 = por %p94, %p95
      %s98 = sadd.s32 %s97, 1
      %p101 = scmp.eq.s32.totalorder %s21, 1
      %p102 = scmp.ne.s32.totalorder %s97, %s99
      %p103 = scmp.eq.s32.totalorder %s21, 0
      %p104 = por %p102, %p103
      %p105 = scmp.ne.s32.totalorder %s97, %s99
      %p106 = scmp.eq.s32.totalorder %s26, 1
      %p107 = por %p105, %p106
      %p108 = scmp.ne.s32.totalorder %s99, %s100
      %p109 = scmp.eq.s32.totalorder %s26, 0
      %p110 = por %p108, %p109
      %p111 = scmp.ne.s32.totalorder %s99, %s100
      %p112 = scmp.eq.s32.totalorder %s27, 1
      %p113 = por %p111, %p112
      %p115 = scmp.ne.s32.totalorder %s100, %s114
      %p116 = scmp.eq.s32.totalorder %s27, 0
      %p117 = por %p115, %p116
      %s119 = sadd.s32 %s118, 1
      %p122 = scmp.eq.s32.totalorder %s21, 1
      %p123 = scmp.ne.s32.totalorder %s118, %s120
      %p124 = scmp.eq.s32.totalorder %s21, 0
      %p125 = por %p123, %p124
      %p126 = scmp.ne.s32.totalorder %s118, %s120
      %p127 = scmp.eq.s32.totalorder %s26, 1
      %p128 = por %p126, %p127
      %p129 = scmp.ne.s32.totalorder %s120, %s121
      %p130 = scmp.eq.s32.totalorder %s26, 0
      %p131 = por %p129, %p130
      %p132 = scmp.ne.s32.totalorder %s120, %s121
      %p133 = scmp.eq.s32.totalorder %s27, 1
      %p134 = por %p132, %p133
      %p136 = scmp.ne.s32.totalorder %s121, %s135
      %p137 = scmp.eq.s32.totalorder %s27, 0
      %p138 = por %p136, %p137
      %s140 = sadd.s32 %s139, 1
      %p143 = scmp.eq.s32.totalorder %s21, 1
      %p144 = scmp.ne.s32.totalorder %s139, %s141
      %p145 = scmp.eq.s32.totalorder %s21, 0
      %p146 = por %p144, %p145
      %p147 = scmp.ne.s32.totalorder %s139, %s141
      %p148 = scmp.eq.s32.totalorder %s26, 1
      %p149 = por %p147, %p148
      %p150 = scmp.ne.s32.totalorder %s141, %s142
      %p151 = scmp.eq.s32.totalorder %s26, 0
      %p152 = por %p150, %p151
      %p153 = scmp.ne.s32.totalorder %s141, %s142
      %p154 = scmp.eq.s32.totalorder %s27, 1
      %p155 = por %p153, %p154
      %p157 = scmp.ne.s32.totalorder %s142, %s156
      %p158 = scmp.eq.s32.totalorder %s27, 0
      %p159 = por %p157, %p158
      %s161 = sadd.s32 %s160, 1
      %p164 = scmp.eq.s32.totalorder %s21, 1
      %p165 = scmp.ne.s32.totalorder %s160, %s162
      %p166 = scmp.eq.s32.totalorder %s21, 0
      %p167 = por %p165, %p166
      %p168 = scmp.ne.s32.totalorder %s160, %s162
      %p169 = scmp.eq.s32.totalorder %s26, 1
      %p170 = por %p168, %p169
      %p171 = scmp.ne.s32.totalorder %s162, %s163
      %p172 = scmp.eq.s32.totalorder %s26, 0
      %p173 = por %p171, %p172
      %p174 = scmp.ne.s32.totalorder %s162, %s163
      %p175 = scmp.eq.s32.totalorder %s27, 1
      %p176 = por %p174, %p175
      %p178 = scmp.ne.s32.totalorder %s163, %s177
      %p179 = scmp.eq.s32.totalorder %s27, 0
      %p180 = por %p178, %p179
      %s182 = sadd.s32 %s181, 1
      %p185 = scmp.eq.s32.totalorder %s21, 1
      %p186 = scmp.ne.s32.totalorder %s181, %s183
      %p187 = scmp.eq.s32.totalorder %s21, 0
      %p188 = por %p186, %p187
      %p189 = scmp.ne.s32.totalorder %s181, %s183
      %p190 = scmp.eq.s32.totalorder %s26, 1
      %p191 = por %p189, %p190
      %p192 = scmp.ne.s32.totalorder %s183, %s184
      %p193 = scmp.eq.s32.totalorder %s26, 0
      %p194 = por %p192, %p193
      %p195 = scmp.ne.s32.totalorder %s183, %s184
      %p196 = scmp.eq.s32.totalorder %s27, 1
      %p197 = por %p195, %p196
      %p199 = scmp.ne.s32.totalorder %s184, %s198
      %p200 = scmp.eq.s32.totalorder %s27, 0
      %p201 = por %p199, %p200
      %s203 = sadd.s32 %s202, 1
      %p206 = scmp.eq.s32.totalorder %s21, 1
      %p207 = scmp.ne.s32.totalorder %s202, %s204
      %p208 = scmp.eq.s32.totalorder %s21, 0
      %p209 = por %p207, %p208
      %p210 = scmp.ne.s32.totalorder %s202, %s204
      %p211 = scmp.eq.s32.totalorder %s26, 1
      %p212 = por %p210, %p211
      %p213 = scmp.ne.s32.totalorder %s204, %s205
      %p214 = scmp.eq.s32.totalorder %s26, 0
      %p215 = por %p213, %p214
      %p216 = scmp.ne.s32.totalorder %s204, %s205
      %p217 = scmp.eq.s32.totalorder %s27, 1
      %p218 = por %p216, %p217
      %p220 = scmp.ne.s32.totalorder %s205, %s219
      %p221 = scmp.eq.s32.totalorder %s27, 0
      %p222 = por %p220, %p221
      %s224 = sadd.s32 %s223, 1
      %p227 = scmp.eq.s32.totalorder %s21, 1
      %p228 = scmp.ne.s32.totalorder %s223, %s225
      %p229 = scmp.eq.s32.totalorder %s21, 0
      %p230 = por %p228, %p229
      %p231 = scmp.ne.s32.totalorder %s223, %s225
      %p232 = scmp.eq.s32.totalorder %s26, 1
      %p233 = por %p231, %p232
      %p234 = scmp.ne.s32.totalorder %s225, %s226
      %p235 = scmp.eq.s32.totalorder %s26, 0
      %p236 = por %p234, %p235
      %p237 = scmp.ne.s32.totalorder %s225, %s226
      %p238 = scmp.eq.s32.totalorder %s27, 1
      %p239 = por %p237, %p238
      %p241 = scmp.ne.s32.totalorder %s226, %s240
      %p242 = scmp.eq.s32.totalorder %s27, 0
      %p243 = por %p241, %p242
      %s245 = sadd.s32 %s244, 1
      %p248 = scmp.eq.s32.totalorder %s21, 1
      %p249 = scmp.ne.s32.totalorder %s244, %s246
      %p250 = scmp.eq.s32.totalorder %s21, 0
      %p251 = por %p249, %p250
      %p252 = scmp.ne.s32.totalorder %s244, %s246
      %p253 = scmp.eq.s32.totalorder %s26, 1
      %p254 = por %p252, %p253
      %p255 = scmp.ne.s32.totalorder %s246, %s247
      %p256 = scmp.eq.s32.totalorder %s26, 0
      %p257 = por %p255, %p256
      %p258 = scmp.ne.s32.totalorder %s246, %s247
      %p259 = scmp.eq.s32.totalorder %s27, 1
      %p260 = por %p258, %p259
      %p262 = scmp.ne.s32.totalorder %s247, %s261
      %p263 = scmp.eq.s32.totalorder %s27, 0
      %p264 = por %p262, %p263
      %s266 = sadd.s32 %s265, 1
      %p269 = scmp.eq.s32.totalorder %s21, 1
      %p270 = scmp.ne.s32.totalorder %s265, %s267
      %p271 = scmp.eq.s32.totalorder %s21, 0
      %p272 = por %p270, %p271
      %p273 = scmp.ne.s32.totalorder %s265, %s267
      %p274 = scmp.eq.s32.totalorder %s26, 1
      %p275 = por %p273, %p274
      %p276 = scmp.ne.s32.totalorder %s267, %s268
      %p277 = scmp.eq.s32.totalorder %s26, 0
      %p278 = por %p276, %p277
      %p279 = scmp.ne.s32.totalorder %s267, %s268
      %p280 = scmp.eq.s32.totalorder %s27, 1
      %p281 = por %p279, %p280
      %p283 = scmp.ne.s32.totalorder %s268, %s282
      %p284 = scmp.eq.s32.totalorder %s27, 0
      %p285 = por %p283, %p284
      %s286 = ssub.s32 %s21, %s28
      %p287 = scmp.eq.s32.totalorder %s286, 0
      %s289 = sadd.s32 %s288, 1
      %s290 = scalar_select %p287, %s288, %s289
      %p293 = pneg %p287
      %p294 = scmp.eq.s32.totalorder %s21, 1
      %p295 = por %p293, %p294
      %p296 = scmp.ne.s32.totalorder %s288, %s291
      %p297 = scmp.eq.s32.totalorder %s21, 0
      %p298 = por %p296, %p297
      %p299 = scmp.ne.s32.totalorder %s288, %s291
      %p300 = scmp.eq.s32.totalorder %s26, 1
      %p301 = por %p299, %p300
      %p302 = scmp.ne.s32.totalorder %s291, %s292
      %p303 = scmp.eq.s32.totalorder %s26, 0
      %p304 = por %p302, %p303
      %p305 = scmp.ne.s32.totalorder %s291, %s292
      %p306 = scmp.eq.s32.totalorder %s27, 1
      %p307 = por %p305, %p306
      %p309 = scmp.ne.s32.totalorder %s292, %s308
      %p310 = scmp.eq.s32.totalorder %s27, 0
      %p311 = por %p309, %p310
      %p312 = scmp.le.s32.totalorder 1, %s21
      %p313 = scmp.lt.s32.totalorder %s21, 3
      %p314 = pnand %p312, %p313
      %p315 = pneg %p314
      // Predicated region
      $region9: #{tpu_custom_call.1} parent=5 // pred_check
        _
      $region10: #{tpu_custom_call.1} parent=5 // pred_check_branch
        %317 = sbr.rel (%p314) target = $region12
      $region11: #{tpu_custom_call.1} parent=5 // pred_region
        %s318 = ssub.s32 %s21, 1
        // Predicated region
        $region13: #{tpu_custom_call.1} parent=11 // pred_check
          %p319 = pneg %p68
        $region14: #{tpu_custom_call.1} parent=11 // pred_check_branch
          %321 = sbr.rel (%p319) target = $region16
        $region15: #{tpu_custom_call.1} parent=11 // pred_region
          _
        $region16: #{tpu_custom_call.1} parent=11 // pred_fallthru
          _
        // Predicated region
        $region17: #{tpu_custom_call.1} parent=11 // pred_check
          %p322 = pneg %p89
        $region18: #{tpu_custom_call.1} parent=11 // pred_check_branch
          %324 = sbr.rel (%p322) target = $region20
        $region19: #{tpu_custom_call.1} parent=11 // pred_region
          _
        $region20: #{tpu_custom_call.1} parent=11 // pred_fallthru
          _
        // Predicated region
        $region21: #{tpu_custom_call.1} parent=11 // pred_check
          %p325 = pneg %p110
        $region22: #{tpu_custom_call.1} parent=11 // pred_check_branch
          %327 = sbr.rel (%p325) target = $region24
        $region23: #{tpu_custom_call.1} parent=11 // pred_region
          _
        $region24: #{tpu_custom_call.1} parent=11 // pred_fallthru
          _
        // Predicated region
        $region25: #{tpu_custom_call.1} parent=11 // pred_check
          %p328 = pneg %p131
        $region26: #{tpu_custom_call.1} parent=11 // pred_check_branch
          %330 = sbr.rel (%p328) target = $region28
        $region27: #{tpu_custom_call.1} parent=11 // pred_region
          _
        $region28: #{tpu_custom_call.1} parent=11 // pred_fallthru
          _
        // Predicated region
        $region29: #{tpu_custom_call.1} parent=11 // pred_check
          %p331 = pneg %p152
        $region30: #{tpu_custom_call.1} parent=11 // pred_check_branch
          %333 = sbr.rel (%p331) target = $region32
        $region31: #{tpu_custom_call.1} parent=11 // pred_region
          _
        $region32: #{tpu_custom_call.1} parent=11 // pred_fallthru
          _
        // Predicated region
        $region33: #{tpu_custom_call.1} parent=11 // pred_check
          %p334 = pneg %p173
        $region34: #{tpu_custom_call.1} parent=11 // pred_check_branch
          %336 = sbr.rel (%p334) target = $region36
        $region35: #{tpu_custom_call.1} parent=11 // pred_region
          _
        $region36: #{tpu_custom_call.1} parent=11 // pred_fallthru
          _
        // Predicated region
        $region37: #{tpu_custom_call.1} parent=11 // pred_check
          %p337 = pneg %p194
        $region38: #{tpu_custom_call.1} parent=11 // pred_check_branch
          %339 = sbr.rel (%p337) target = $region40
        $region39: #{tpu_custom_call.1} parent=11 // pred_region
          _
        $region40: #{tpu_custom_call.1} parent=11 // pred_fallthru
          _
        // Predicated region
        $region41: #{tpu_custom_call.1} parent=11 // pred_check
          %p340 = pneg %p215
        $region42: #{tpu_custom_call.1} parent=11 // pred_check_branch
          %342 = sbr.rel (%p340) target = $region44
        $region43: #{tpu_custom_call.1} parent=11 // pred_region
          _
        $region44: #{tpu_custom_call.1} parent=11 // pred_fallthru
          _
        // Predicated region
        $region45: #{tpu_custom_call.1} parent=11 // pred_check
          %p343 = pneg %p236
        $region46: #{tpu_custom_call.1} parent=11 // pred_check_branch
          %345 = sbr.rel (%p343) target = $region48
        $region47: #{tpu_custom_call.1} parent=11 // pred_region
          _
        $region48: #{tpu_custom_call.1} parent=11 // pred_fallthru
          _
        // Predicated region
        $region49: #{tpu_custom_call.1} parent=11 // pred_check
          %p346 = pneg %p257
        $region50: #{tpu_custom_call.1} parent=11 // pred_check_branch
          %348 = sbr.rel (%p346) target = $region52
        $region51: #{tpu_custom_call.1} parent=11 // pred_region
          _
        $region52: #{tpu_custom_call.1} parent=11 // pred_fallthru
          _
        // Predicated region
        $region53: #{tpu_custom_call.1} parent=11 // pred_check
          %p349 = pneg %p278
        $region54: #{tpu_custom_call.1} parent=11 // pred_check_branch
          %351 = sbr.rel (%p349) target = $region56
        $region55: #{tpu_custom_call.1} parent=11 // pred_region
          _
        $region56: #{tpu_custom_call.1} parent=11 // pred_fallthru
          _
      $region12: #{tpu_custom_call.1} parent=5 // pred_fallthru
        _
      %p352 = scmp.lt.s32.totalorder %s21, 2
      // Predicated region
      $region57: #{tpu_custom_call.1} parent=5 // pred_check
        %p353 = pneg %p352
      $region58: #{tpu_custom_call.1} parent=5 // pred_check_branch
        %355 = sbr.rel (%p353) target = $region60
      $region59: #{tpu_custom_call.1} parent=5 // pred_region
        // Predicated region
        $region61: #{tpu_custom_call.1} parent=59 // pred_check
          %p356 = pneg %p41
        $region62: #{tpu_custom_call.1} parent=59 // pred_check_branch
          %358 = sbr.rel (%p356) target = $region64
        $region63: #{tpu_custom_call.1} parent=59 // pred_region
          %p359 = scmp.lt.s32.totalorder %s21, 1
          %s360 = scalar_select %p359, %s21, 1
          %s361 = smul.addr %s360, 8
          %s362 = scalar_lea.vmem %s0, %s361
        $region64: #{tpu_custom_call.1} parent=59 // pred_fallthru
          _
      $region60: #{tpu_custom_call.1} parent=5 // pred_fallthru
        _
      %p363 = scmp.le.s32.totalorder 1, %s21
      %p364 = scmp.lt.s32.totalorder %s21, 3
      %p365 = pnand %p363, %p364
      %p366 = pneg %p365
      // Predicated region
      $region65: #{tpu_custom_call.1} parent=5 // pred_check
        _
      $region66: #{tpu_custom_call.1} parent=5 // pred_check_branch
        %368 = sbr.rel (%p365) target = $region68
      $region67: #{tpu_custom_call.1} parent=5 // pred_region
        %s369 = ssub.s32 %s21, 1
        %p370 = scmp.lt.s32.totalorder %s26, 1
        %s371 = scalar_select %p370, %s26, 1
        %s372 = smul.addr %s371, 8
        %s373 = scalar_lea.vmem %s0, %s372
        %p374 = pneg %p47
        %p375 = pneg %p44
        %p376 = pneg %p68
        %p377 = pneg %p65
        %p378 = pneg %p89
        %p379 = pneg %p86
        %p380 = pneg %p110
        %p381 = pneg %p107
        %p382 = pneg %p131
        %p383 = pneg %p128
        %p384 = pneg %p152
        %p385 = pneg %p149
        %p386 = pneg %p173
        %p387 = pneg %p170
        %p388 = pneg %p194
        %p389 = pneg %p191
        %p390 = pneg %p215
        %p391 = pneg %p212
        %p392 = pneg %p236
        %p393 = pneg %p233
        %p394 = pneg %p257
        %p395 = pneg %p254
        %p396 = pneg %p278
        %p397 = pneg %p275
        %p398 = pneg %p304
        %p399 = pneg %p301
        %s400 = sand.u32 %s291, 1
        %s401 = scalar_lea.sflag [#allocation3], %s400
        %s402 = sand.u32 %s291, 1
        %s403 = smul.addr %s402, 8
        %s404 = scalar_lea.vmem [#allocation2], %s403
        %p405 = scmp.lt.s32.totalorder %s26, 1
        %s406 = scalar_select %p405, %s26, 1
        %s407 = smul.addr %s406, 8
        %s408 = scalar_lea.vmem %s0, %s407
        %v409 = vld [vmem:[%s408] sm:$0xff]
        %v410 = vld [vmem:[%s1] sm:$0x1]
        %v411 = vld [vmem:[%s2] sm:$0x1]
        %vm412 = vcmask 523264
        %v413 = vsel %vm412, %v409, 0.0
        %414 = vadd.xlane.f32.xlu0 %v413
        %v415 = vpop.xlane.xlu0 %414
        %v416 = vrcp.pop 64.0
        %v417 = vmul.f32 %v415, %v416
        %v418 = vsub.f32 %v409, %v417
        %v419 = vmul.f32 %v418, %v418
        %v420 = vsel %vm412, %v419, 0.0
        %421 = vadd.xlane.f32.xlu0 %v420
        %v422 = vpop.xlane.xlu0 %421
        %v423 = vmul.f32 %v422, %v416
        %v424 = vadd.f32 %v423, 1e-05
        %v425 = vrsqrt.pop %v424
        %v426 = vmul.f32 %v418, %v425
        %v428 = vlaneseq
        %v429 = vshrl.u32 %v428, 7
        %v430 = vsub.s32 0, %v429
        %v431 = vrot.slane %v410, %v430
        %v433 = vmul.f32 %v426, %v431
        %v435 = vlaneseq
        %v436 = vshrl.u32 %v435, 7
        %v437 = vsub.s32 0, %v436
        %v438 = vrot.slane %v411, %v437
        %v440 = vadd.f32 %v433, %v438
        %v441 = vld [vmem:[%s3] sm:$0xff]
        %v442 = vld [vmem:[%s3 + $0x8] sm:$0xff]
        %v443 = vld [vmem:[%s3 + $0x10] sm:$0xff]
        %v444 = vld [vmem:[%s3 + $0x18] sm:$0xff]
        %v445 = vld [vmem:[%s3 + $0x20] sm:$0xff]
        %v446 = vld [vmem:[%s3 + $0x28] sm:$0xff]
        %v447 = vld [vmem:[%s3 + $0x30] sm:$0xff]
        %v448 = vld [vmem:[%s3 + $0x38] sm:$0xff]
        %v449 = vld [vmem:[%s3 + $0x40] sm:$0xff]
        %v450 = vld [vmem:[%s3 + $0x48] sm:$0xff]
        %v451 = vld [vmem:[%s3 + $0x50] sm:$0xff]
        %v452 = vld [vmem:[%s3 + $0x58] sm:$0xff]
        %v453 = vld [vmem:[%s3 + $0x60] sm:$0xff]
        %v454 = vld [vmem:[%s3 + $0x68] sm:$0xff]
        %v455 = vld [vmem:[%s3 + $0x70] sm:$0xff]
        %v456 = vld [vmem:[%s3 + $0x78] sm:$0xff]
        %v458 = vsel %vm412, %v440, 0
        %460 = vmatprep.subr.mxu0 0.0
        %461 = vmatpush1.msra.mxu0 0.0
        %462 = vmatprep.subr.mxu0 0.0
        %463 = vmatpush1.msra.mxu0 0.0
        %464 = vmatprep.subr.mxu0 0.0
        %465 = vmatpush1.msra.mxu0 0.0
        %466 = vmatprep.subr.mxu0 0.0
        %467 = vmatpush1.msra.mxu0 0.0
        %468 = vmatprep.subr.mxu0 0.0
        %469 = vmatpush1.msra.mxu0 0.0
        %470 = vmatprep.subr.mxu0 0.0
        %471 = vmatpush1.msra.mxu0 0.0
        %472 = vmatprep.subr.mxu0 0.0
        %473 = vmatpush1.msra.mxu0 0.0
        %474 = vmatprep.subr.mxu0 0.0
        %475 = vmatpush1.msra.mxu0 0.0
        %476 = vmatprep.subr.mxu0 %v456
        %477 = vmatpush1.msra.mxu0 %v455
        %478 = vmatprep.subr.mxu0 %v454
        %479 = vmatpush1.msra.mxu0 %v453
        %480 = vmatprep.subr.mxu0 %v452
        %481 = vmatpush1.msra.mxu0 %v451
        %482 = vmatprep.subr.mxu0 %v450
        %483 = vmatpush1.msra.mxu0 %v449
        %484 = vmatprep.subr.mxu0 %v448
        %485 = vmatpush1.msra.mxu0 %v447
        %486 = vmatprep.subr.mxu0 %v446
        %487 = vmatpush1.msra.mxu0 %v445
        %488 = vmatprep.subr.mxu0 %v444
        %489 = vmatpush1.msra.mxu0 %v443
        %490 = vmatprep.subr.mxu0 %v442
        %491 = vmatpush1.msra.mxu0 %v441
        %492 = vmatprep.subr.mxu0 0.0
        %493 = vmatpush2.msra.mxu0 0.0
        %494 = vmatprep.subr.mxu0 0.0
        %495 = vmatpush2.msra.mxu0 0.0
        %496 = vmatprep.subr.mxu0 0.0
        %497 = vmatpush2.msra.mxu0 0.0
        %498 = vmatprep.subr.mxu0 0.0
        %499 = vmatpush2.msra.mxu0 0.0
        %500 = vmatprep.subr.mxu0 0.0
        %501 = vmatpush2.msra.mxu0 0.0
        %502 = vmatprep.subr.mxu0 0.0
        %503 = vmatpush2.msra.mxu0 0.0
        %504 = vmatprep.subr.mxu0 0.0
        %505 = vmatpush2.msra.mxu0 0.0
        %506 = vmatprep.subr.mxu0 0.0
        %507 = vmatpush2.msra.mxu0 0.0
        %508 = vmatprep.subr.mxu0 0.0
        %509 = vmatpush2.msra.mxu0 0.0
        %510 = vmatprep.subr.mxu0 0.0
        %511 = vmatpush2.msra.mxu0 0.0
        %512 = vmatprep.subr.mxu0 0.0
        %513 = vmatpush2.msra.mxu0 0.0
        %514 = vmatprep.subr.mxu0 0.0
        %515 = vmatpush2.msra.mxu0 0.0
        %516 = vmatprep.subr.mxu0 0.0
        %517 = vmatpush2.msra.mxu0 0.0
        %518 = vmatprep.subr.mxu0 0.0
        %519 = vmatpush2.msra.mxu0 0.0
        %520 = vmatprep.subr.mxu0 0.0
        %521 = vmatpush2.msra.mxu0 0.0
        %522 = vmatprep.subr.mxu0 0.0
        %523 = vmatpush2.msra.mxu0 0.0
        %524 = vmatprep.mubr.f32.mxu0 0.0
        %525 = vmatmul.mubr.f32.gmra.mxu0 %v458
        %v526 = vpop.f32.mrf.mxu0
        %v527 = vadd.f32 0.0, %v526
        %v528 = vpop.f32.mrf.mxu0
        %v529 = vadd.f32 0.0, %v528
        %530 = vdwg.mxu0
        %532 = vrot.lane.b32.xlu0 %v527, 112
        %v533 = vpop.permute.xlu0 %532
        %535 = vrot.lane.b32.xlu0 %v527, 96
        %v536 = vpop.permute.xlu0 %535
        %538 = vrot.lane.b32.xlu0 %v527, 80
        %v539 = vpop.permute.xlu0 %538
        %v541 = vcombine.low %v527, %v536
        %v542 = vcombine.high %v527, %v536
        %v544 = vunpack.c.l.s4 1983009808
        %v545 = vunpack.c.0.s8 %v544
        %v546 = vlaneseq
        %v547 = vshrl.u32 %v546, 7
        %v548 = vsub.s32 %v545, %v547
        %v549 = vrot.slane %v541, %v548
        %v551 = vunpack.c.l.s4 1983009808
        %v552 = vunpack.c.0.s8 %v551
        %v553 = vlaneseq
        %v554 = vshrl.u32 %v553, 7
        %v555 = vsub.s32 %v552, %v554
        %v556 = vrot.slane %v542, %v555
        %v557 = vcombine.low %v533, %v539
        %v558 = vcombine.high %v533, %v539
        %v560 = vunpack.c.l.s4 1983009808
        %v561 = vunpack.c.0.s8 %v560
        %v562 = vlaneseq
        %v563 = vshrl.u32 %v562, 7
        %v564 = vsub.s32 %v561, %v563
        %v565 = vrot.slane %v557, %v564
        %v567 = vunpack.c.l.s4 1983009808
        %v568 = vunpack.c.0.s8 %v567
        %v569 = vlaneseq
        %v570 = vshrl.u32 %v569, 7
        %v571 = vsub.s32 %v568, %v570
        %v572 = vrot.slane %v558, %v571
        %v573 = vcombine.low %v549, %v565
        %v574 = vcombine.high %v549, %v565
        %v576 = vunpack.c.l.s4 1934713408
        %v577 = vunpack.c.0.s8 %v576
        %v578 = vlaneseq
        %v579 = vshrl.u32 %v578, 7
        %v580 = vsub.s32 %v577, %v579
        %v581 = vrot.slane %v573, %v580
        %v583 = vunpack.c.l.s4 1934713408
        %v584 = vunpack.c.0.s8 %v583
        %v585 = vlaneseq
        %v586 = vshrl.u32 %v585, 7
        %v587 = vsub.s32 %v584, %v586
        %v588 = vrot.slane %v574, %v587
        %v589 = vcombine.low %v556, %v572
        %v590 = vcombine.high %v556, %v572
        %v592 = vunpack.c.l.s4 1934713408
        %v593 = vunpack.c.0.s8 %v592
        %v594 = vlaneseq
        %v595 = vshrl.u32 %v594, 7
        %v596 = vsub.s32 %v593, %v595
        %v597 = vrot.slane %v589, %v596
        %v599 = vunpack.c.l.s4 1934713408
        %v600 = vunpack.c.0.s8 %v599
        %v601 = vlaneseq
        %v602 = vshrl.u32 %v601, 7
        %v603 = vsub.s32 %v600, %v602
        %v604 = vrot.slane %v590, %v603
        %v605 = vcombine.high %v581, 0.0
        %v606 = vcombine.high %v588, 0.0
        %v607 = vcombine.high %v597, 0.0
        %v608 = vcombine.high %v604, 0.0
        %v609 = vcombine.low %v581, %v588
        %v611 = vunpack.c.l.s4 1983009808
        %v612 = vunpack.c.0.s8 %v611
        %v613 = vlaneseq
        %v614 = vshrl.u32 %v613, 7
        %v615 = vsub.s32 %v612, %v614
        %v616 = vrot.slane %v609, %v615
        %v617 = vcombine.low %v605, %v606
        %v619 = vunpack.c.l.s4 1983009808
        %v620 = vunpack.c.0.s8 %v619
        %v621 = vlaneseq
        %v622 = vshrl.u32 %v621, 7
        %v623 = vsub.s32 %v620, %v622
        %v624 = vrot.slane %v617, %v623
        %v625 = vcombine.low %v597, %v604
        %v627 = vunpack.c.l.s4 1983009808
        %v628 = vunpack.c.0.s8 %v627
        %v629 = vlaneseq
        %v630 = vshrl.u32 %v629, 7
        %v631 = vsub.s32 %v628, %v630
        %v632 = vrot.slane %v625, %v631
        %v633 = vcombine.low %v607, %v608
        %v635 = vunpack.c.l.s4 1983009808
        %v636 = vunpack.c.0.s8 %v635
        %v637 = vlaneseq
        %v638 = vshrl.u32 %v637, 7
        %v639 = vsub.s32 %v636, %v638
        %v640 = vrot.slane %v633, %v639
        %v641 = vcombine.low %v616, %v624
        %v642 = vcombine.high %v616, %v624
        %v644 = vunpack.c.l.s4 1934713408
        %v645 = vunpack.c.0.s8 %v644
        %v646 = vlaneseq
        %v647 = vshrl.u32 %v646, 7
        %v648 = vsub.s32 %v645, %v647
        %v649 = vrot.slane %v641, %v648
        %v651 = vunpack.c.l.s4 1934713408
        %v652 = vunpack.c.0.s8 %v651
        %v653 = vlaneseq
        %v654 = vshrl.u32 %v653, 7
        %v655 = vsub.s32 %v652, %v654
        %v656 = vrot.slane %v642, %v655
        %v657 = vcombine.low %v632, %v640
        %v658 = vcombine.high %v632, %v640
        %v660 = vunpack.c.l.s4 1934713408
        %v661 = vunpack.c.0.s8 %v660
        %v662 = vlaneseq
        %v663 = vshrl.u32 %v662, 7
        %v664 = vsub.s32 %v661, %v663
        %v665 = vrot.slane %v657, %v664
        %v667 = vunpack.c.l.s4 1934713408
        %v668 = vunpack.c.0.s8 %v667
        %v669 = vlaneseq
        %v670 = vshrl.u32 %v669, 7
        %v671 = vsub.s32 %v668, %v670
        %v672 = vrot.slane %v658, %v671
        %v673 = vcombine.low %v649, %v665
        %v674 = vcombine.high %v649, %v665
        %v675 = vcombine.low %v656, %v672
        %v676 = vcombine.high %v656, %v672
        %677 = vrot.lane.b32.xlu0 %v527, 64
        %v678 = vpop.permute.xlu0 %677
        %679 = vrot.lane.b32.xlu0 %v533, 64
        %v680 = vpop.permute.xlu0 %679
        %681 = vrot.lane.b32.xlu0 %v536, 64
        %v682 = vpop.permute.xlu0 %681
        %683 = vrot.lane.b32.xlu0 %v539, 64
        %v684 = vpop.permute.xlu0 %683
        %v689 = vcombine.low %v678, %v682
        %v690 = vcombine.high %v678, %v682
        %v692 = vunpack.c.l.s4 1983009808
        %v693 = vunpack.c.0.s8 %v692
        %v694 = vlaneseq
        %v695 = vshrl.u32 %v694, 7
        %v696 = vsub.s32 %v693, %v695
        %v697 = vrot.slane %v689, %v696
        %v699 = vunpack.c.l.s4 1983009808
        %v700 = vunpack.c.0.s8 %v699
        %v701 = vlaneseq
        %v702 = vshrl.u32 %v701, 7
        %v703 = vsub.s32 %v700, %v702
        %v704 = vrot.slane %v690, %v703
        %v705 = vcombine.low %v680, %v684
        %v706 = vcombine.high %v680, %v684
        %v708 = vunpack.c.l.s4 1983009808
        %v709 = vunpack.c.0.s8 %v708
        %v710 = vlaneseq
        %v711 = vshrl.u32 %v710, 7
        %v712 = vsub.s32 %v709, %v711
        %v713 = vrot.slane %v705, %v712
        %v715 = vunpack.c.l.s4 1983009808
        %v716 = vunpack.c.0.s8 %v715
        %v717 = vlaneseq
        %v718 = vshrl.u32 %v717, 7
        %v719 = vsub.s32 %v716, %v718
        %v720 = vrot.slane %v706, %v719
        %v721 = vcombine.low %v697, %v713
        %v722 = vcombine.high %v697, %v713
        %v724 = vunpack.c.l.s4 1934713408
        %v725 = vunpack.c.0.s8 %v724
        %v726 = vlaneseq
        %v727 = vshrl.u32 %v726, 7
        %v728 = vsub.s32 %v725, %v727
        %v729 = vrot.slane %v721, %v728
        %v731 = vunpack.c.l.s4 1934713408
        %v732 = vunpack.c.0.s8 %v731
        %v733 = vlaneseq
        %v734 = vshrl.u32 %v733, 7
        %v735 = vsub.s32 %v732, %v734
        %v736 = vrot.slane %v722, %v735
        %v737 = vcombine.low %v704, %v720
        %v738 = vcombine.high %v704, %v720
        %v740 = vunpack.c.l.s4 1934713408
        %v741 = vunpack.c.0.s8 %v740
        %v742 = vlaneseq
        %v743 = vshrl.u32 %v742, 7
        %v744 = vsub.s32 %v741, %v743
        %v745 = vrot.slane %v737, %v744
        %v747 = vunpack.c.l.s4 1934713408
        %v748 = vunpack.c.0.s8 %v747
        %v749 = vlaneseq
        %v750 = vshrl.u32 %v749, 7
        %v751 = vsub.s32 %v748, %v750
        %v752 = vrot.slane %v738, %v751
        %v753 = vcombine.high %v729, 0.0
        %v754 = vcombine.high %v736, 0.0
        %v755 = vcombine.high %v745, 0.0
        %v756 = vcombine.high %v752, 0.0
        %v757 = vcombine.low %v729, %v736
        %v759 = vunpack.c.l.s4 1983009808
        %v760 = vunpack.c.0.s8 %v759
        %v761 = vlaneseq
        %v762 = vshrl.u32 %v761, 7
        %v763 = vsub.s32 %v760, %v762
        %v764 = vrot.slane %v757, %v763
        %v765 = vcombine.low %v753, %v754
        %v767 = vunpack.c.l.s4 1983009808
        %v768 = vunpack.c.0.s8 %v767
        %v769 = vlaneseq
        %v770 = vshrl.u32 %v769, 7
        %v771 = vsub.s32 %v768, %v770
        %v772 = vrot.slane %v765, %v771
        %v773 = vcombine.low %v745, %v752
        %v775 = vunpack.c.l.s4 1983009808
        %v776 = vunpack.c.0.s8 %v775
        %v777 = vlaneseq
        %v778 = vshrl.u32 %v777, 7
        %v779 = vsub.s32 %v776, %v778
        %v780 = vrot.slane %v773, %v779
        %v781 = vcombine.low %v755, %v756
        %v783 = vunpack.c.l.s4 1983009808
        %v784 = vunpack.c.0.s8 %v783
        %v785 = vlaneseq
        %v786 = vshrl.u32 %v785, 7
        %v787 = vsub.s32 %v784, %v786
        %v788 = vrot.slane %v781, %v787
        %v789 = vcombine.low %v764, %v772
        %v790 = vcombine.high %v764, %v772
        %v792 = vunpack.c.l.s4 1934713408
        %v793 = vunpack.c.0.s8 %v792
        %v794 = vlaneseq
        %v795 = vshrl.u32 %v794, 7
        %v796 = vsub.s32 %v793, %v795
        %v797 = vrot.slane %v789, %v796
        %v799 = vunpack.c.l.s4 1934713408
        %v800 = vunpack.c.0.s8 %v799
        %v801 = vlaneseq
        %v802 = vshrl.u32 %v801, 7
        %v803 = vsub.s32 %v800, %v802
        %v804 = vrot.slane %v790, %v803
        %v805 = vcombine.low %v780, %v788
        %v806 = vcombine.high %v780, %v788
        %v808 = vunpack.c.l.s4 1934713408
        %v809 = vunpack.c.0.s8 %v808
        %v810 = vlaneseq
        %v811 = vshrl.u32 %v810, 7
        %v812 = vsub.s32 %v809, %v811
        %v813 = vrot.slane %v805, %v812
        %v815 = vunpack.c.l.s4 1934713408
        %v816 = vunpack.c.0.s8 %v815
        %v817 = vlaneseq
        %v818 = vshrl.u32 %v817, 7
        %v819 = vsub.s32 %v816, %v818
        %v820 = vrot.slane %v806, %v819
        %v821 = vcombine.low %v797, %v813
        %v822 = vcombine.high %v797, %v813
        %v823 = vcombine.low %v804, %v820
        %v824 = vcombine.high %v804, %v820
        %826 = vrot.lane.b32.xlu0 %v529, 112
        %v827 = vpop.permute.xlu0 %826
        %829 = vrot.lane.b32.xlu0 %v529, 96
        %v830 = vpop.permute.xlu0 %829
        %832 = vrot.lane.b32.xlu0 %v529, 80
        %v833 = vpop.permute.xlu0 %832
        %v835 = vcombine.low %v529, %v830
        %v836 = vcombine.high %v529, %v830
        %v838 = vunpack.c.l.s4 1983009808
        %v839 = vunpack.c.0.s8 %v838
        %v840 = vlaneseq
        %v841 = vshrl.u32 %v840, 7
        %v842 = vsub.s32 %v839, %v841
        %v843 = vrot.slane %v835, %v842
        %v845 = vunpack.c.l.s4 1983009808
        %v846 = vunpack.c.0.s8 %v845
        %v847 = vlaneseq
        %v848 = vshrl.u32 %v847, 7
        %v849 = vsub.s32 %v846, %v848
        %v850 = vrot.slane %v836, %v849
        %v851 = vcombine.low %v827, %v833
        %v852 = vcombine.high %v827, %v833
        %v854 = vunpack.c.l.s4 1983009808
        %v855 = vunpack.c.0.s8 %v854
        %v856 = vlaneseq
        %v857 = vshrl.u32 %v856, 7
        %v858 = vsub.s32 %v855, %v857
        %v859 = vrot.slane %v851, %v858
        %v861 = vunpack.c.l.s4 1983009808
        %v862 = vunpack.c.0.s8 %v861
        %v863 = vlaneseq
        %v864 = vshrl.u32 %v863, 7
        %v865 = vsub.s32 %v862, %v864
        %v866 = vrot.slane %v852, %v865
        %v867 = vcombine.low %v843, %v859
        %v868 = vcombine.high %v843, %v859
        %v870 = vunpack.c.l.s4 1934713408
        %v871 = vunpack.c.0.s8 %v870
        %v872 = vlaneseq
        %v873 = vshrl.u32 %v872, 7
        %v874 = vsub.s32 %v871, %v873
        %v875 = vrot.slane %v867, %v874
        %v877 = vunpack.c.l.s4 1934713408
        %v878 = vunpack.c.0.s8 %v877
        %v879 = vlaneseq
        %v880 = vshrl.u32 %v879, 7
        %v881 = vsub.s32 %v878, %v880
        %v882 = vrot.slane %v868, %v881
        %v883 = vcombine.low %v850, %v866
        %v884 = vcombine.high %v850, %v866
        %v886 = vunpack.c.l.s4 1934713408
        %v887 = vunpack.c.0.s8 %v886
        %v888 = vlaneseq
        %v889 = vshrl.u32 %v888, 7
        %v890 = vsub.s32 %v887, %v889
        %v891 = vrot.slane %v883, %v890
        %v893 = vunpack.c.l.s4 1934713408
        %v894 = vunpack.c.0.s8 %v893
        %v895 = vlaneseq
        %v896 = vshrl.u32 %v895, 7
        %v897 = vsub.s32 %v894, %v896
        %v898 = vrot.slane %v884, %v897
        %v899 = vcombine.high %v875, 0.0
        %v900 = vcombine.high %v882, 0.0
        %v901 = vcombine.high %v891, 0.0
        %v902 = vcombine.high %v898, 0.0
        %v903 = vcombine.low %v875, %v882
        %v905 = vunpack.c.l.s4 1983009808
        %v906 = vunpack.c.0.s8 %v905
        %v907 = vlaneseq
        %v908 = vshrl.u32 %v907, 7
        %v909 = vsub.s32 %v906, %v908
        %v910 = vrot.slane %v903, %v909
        %v911 = vcombine.low %v899, %v900
        %v913 = vunpack.c.l.s4 1983009808
        %v914 = vunpack.c.0.s8 %v913
        %v915 = vlaneseq
        %v916 = vshrl.u32 %v915, 7
        %v917 = vsub.s32 %v914, %v916
        %v918 = vrot.slane %v911, %v917
        %v919 = vcombine.low %v891, %v898
        %v921 = vunpack.c.l.s4 1983009808
        %v922 = vunpack.c.0.s8 %v921
        %v923 = vlaneseq
        %v924 = vshrl.u32 %v923, 7
        %v925 = vsub.s32 %v922, %v924
        %v926 = vrot.slane %v919, %v925
        %v927 = vcombine.low %v901, %v902
        %v929 = vunpack.c.l.s4 1983009808
        %v930 = vunpack.c.0.s8 %v929
        %v931 = vlaneseq
        %v932 = vshrl.u32 %v931, 7
        %v933 = vsub.s32 %v930, %v932
        %v934 = vrot.slane %v927, %v933
        %v935 = vcombine.low %v910, %v918
        %v936 = vcombine.high %v910, %v918
        %v938 = vunpack.c.l.s4 1934713408
        %v939 = vunpack.c.0.s8 %v938
        %v940 = vlaneseq
        %v941 = vshrl.u32 %v940, 7
        %v942 = vsub.s32 %v939, %v941
        %v943 = vrot.slane %v935, %v942
        %v945 = vunpack.c.l.s4 1934713408
        %v946 = vunpack.c.0.s8 %v945
        %v947 = vlaneseq
        %v948 = vshrl.u32 %v947, 7
        %v949 = vsub.s32 %v946, %v948
        %v950 = vrot.slane %v936, %v949
        %v951 = vcombine.low %v926, %v934
        %v952 = vcombine.high %v926, %v934
        %v954 = vunpack.c.l.s4 1934713408
        %v955 = vunpack.c.0.s8 %v954
        %v956 = vlaneseq
        %v957 = vshrl.u32 %v956, 7
        %v958 = vsub.s32 %v955, %v957
        %v959 = vrot.slane %v951, %v958
        %v961 = vunpack.c.l.s4 1934713408
        %v962 = vunpack.c.0.s8 %v961
        %v963 = vlaneseq
        %v964 = vshrl.u32 %v963, 7
        %v965 = vsub.s32 %v962, %v964
        %v966 = vrot.slane %v952, %v965
        %v967 = vcombine.low %v943, %v959
        %v968 = vcombine.high %v943, %v959
        %v969 = vcombine.low %v950, %v966
        %v970 = vcombine.high %v950, %v966
        %vm971 = vcmask 130048
        %v973 = vsel %vm971, %v673, 0
        %v976 = vsel %vm971, %v821, 0
        %978 = vmatprep.subr.mxu0 0.0
        %979 = vmatpush1.xpose.msra.mxu0 0.0
        %980 = vmatprep.subr.mxu0 0.0
        %981 = vmatpush1.xpose.msra.mxu0 0.0
        %982 = vmatprep.subr.mxu0 0.0
        %983 = vmatpush1.xpose.msra.mxu0 0.0
        %984 = vmatprep.subr.mxu0 0.0
        %985 = vmatpush1.xpose.msra.mxu0 0.0
        %986 = vmatprep.subr.mxu0 0.0
        %987 = vmatpush1.xpose.msra.mxu0 0.0
        %988 = vmatprep.subr.mxu0 0.0
        %989 = vmatpush1.xpose.msra.mxu0 0.0
        %990 = vmatprep.subr.mxu0 0.0
        %991 = vmatpush1.xpose.msra.mxu0 0.0
        %992 = vmatprep.subr.mxu0 0.0
        %993 = vmatpush1.xpose.msra.mxu0 0.0
        %994 = vmatprep.subr.mxu0 0.0
        %995 = vmatpush1.xpose.msra.mxu0 0.0
        %996 = vmatprep.subr.mxu0 0.0
        %997 = vmatpush1.xpose.msra.mxu0 0.0
        %998 = vmatprep.subr.mxu0 0.0
        %999 = vmatpush1.xpose.msra.mxu0 0.0
        %1000 = vmatprep.subr.mxu0 0.0
        %1001 = vmatpush1.xpose.msra.mxu0 0.0
        %1002 = vmatprep.subr.mxu0 0.0
        %1003 = vmatpush1.xpose.msra.mxu0 0.0
        %1004 = vmatprep.subr.mxu0 0.0
        %1005 = vmatpush1.xpose.msra.mxu0 0.0
        %1006 = vmatprep.subr.mxu0 0.0
        %1007 = vmatpush1.xpose.msra.mxu0 0.0
        %1008 = vmatprep.subr.mxu0 0.0
        %1009 = vmatpush1.xpose.msra.mxu0 %v976
        %1010 = vmatprep.subr.mxu0 0.0
        %1011 = vmatpush2.xpose.msra.mxu0 0.0
        %1012 = vmatprep.subr.mxu0 0.0
        %1013 = vmatpush2.xpose.msra.mxu0 0.0
        %1014 = vmatprep.subr.mxu0 0.0
        %1015 = vmatpush2.xpose.msra.mxu0 0.0
        %1016 = vmatprep.subr.mxu0 0.0
        %1017 = vmatpush2.xpose.msra.mxu0 0.0
        %1018 = vmatprep.subr.mxu0 0.0
        %1019 = vmatpush2.xpose.msra.mxu0 0.0
        %1020 = vmatprep.subr.mxu0 0.0
        %1021 = vmatpush2.xpose.msra.mxu0 0.0
        %1022 = vmatprep.subr.mxu0 0.0
        %1023 = vmatpush2.xpose.msra.mxu0 0.0
        %1024 = vmatprep.subr.mxu0 0.0
        %1025 = vmatpush2.xpose.msra.mxu0 0.0
        %1026 = vmatprep.subr.mxu0 0.0
        %1027 = vmatpush2.xpose.msra.mxu0 0.0
        %1028 = vmatprep.subr.mxu0 0.0
        %1029 = vmatpush2.xpose.msra.mxu0 0.0
        %1030 = vmatprep.subr.mxu0 0.0
        %1031 = vmatpush2.xpose.msra.mxu0 0.0
        %1032 = vmatprep.subr.mxu0 0.0
        %1033 = vmatpush2.xpose.msra.mxu0 0.0
        %1034 = vmatprep.subr.mxu0 0.0
        %1035 = vmatpush2.xpose.msra.mxu0 0.0
        %1036 = vmatprep.subr.mxu0 0.0
        %1037 = vmatpush2.xpose.msra.mxu0 0.0
        %1038 = vmatprep.subr.mxu0 0.0
        %1039 = vmatpush2.xpose.msra.mxu0 0.0
        %1040 = vmatprep.subr.mxu0 0.0
        %1041 = vmatpush2.xpose.msra.mxu0 0.0
        %1042 = vmatprep.mubr.f32.mxu0 0.0
        %1043 = vmatmul.mubr.f32.gmra.mxu0 %v973
        %v1044 = vpop.f32.mrf.mxu0
        %v1045 = vadd.f32 0.0, %v1044
        %v1046 = vpop.f32.mrf.mxu0
        %1047 = vdwg.mxu0
        %v1049 = vsel %vm971, %v674, 0
        %v1052 = vsel %vm971, %v822, 0
        %1054 = vmatprep.subr.mxu0 0.0
        %1055 = vmatpush1.xpose.msra.mxu0 0.0
        %1056 = vmatprep.subr.mxu0 0.0
        %1057 = vmatpush1.xpose.msra.mxu0 0.0
        %1058 = vmatprep.subr.mxu0 0.0
        %1059 = vmatpush1.xpose.msra.mxu0 0.0
        %1060 = vmatprep.subr.mxu0 0.0
        %1061 = vmatpush1.xpose.msra.mxu0 0.0
        %1062 = vmatprep.subr.mxu0 0.0
        %1063 = vmatpush1.xpose.msra.mxu0 0.0
        %1064 = vmatprep.subr.mxu0 0.0
        %1065 = vmatpush1.xpose.msra.mxu0 0.0
        %1066 = vmatprep.subr.mxu0 0.0
        %1067 = vmatpush1.xpose.msra.mxu0 0.0
        %1068 = vmatprep.subr.mxu0 0.0
        %1069 = vmatpush1.xpose.msra.mxu0 0.0
        %1070 = vmatprep.subr.mxu0 0.0
        %1071 = vmatpush1.xpose.msra.mxu0 0.0
        %1072 = vmatprep.subr.mxu0 0.0
        %1073 = vmatpush1.xpose.msra.mxu0 0.0
        %1074 = vmatprep.subr.mxu0 0.0
        %1075 = vmatpush1.xpose.msra.mxu0 0.0
        %1076 = vmatprep.subr.mxu0 0.0
        %1077 = vmatpush1.xpose.msra.mxu0 0.0
        %1078 = vmatprep.subr.mxu0 0.0
        %1079 = vmatpush1.xpose.msra.mxu0 0.0
        %1080 = vmatprep.subr.mxu0 0.0
        %1081 = vmatpush1.xpose.msra.mxu0 0.0
        %1082 = vmatprep.subr.mxu0 0.0
        %1083 = vmatpush1.xpose.msra.mxu0 0.0
        %1084 = vmatprep.subr.mxu0 0.0
        %1085 = vmatpush1.xpose.msra.mxu0 %v1052
        %1086 = vmatprep.subr.mxu0 0.0
        %1087 = vmatpush2.xpose.msra.mxu0 0.0
        %1088 = vmatprep.subr.mxu0 0.0
        %1089 = vmatpush2.xpose.msra.mxu0 0.0
        %1090 = vmatprep.subr.mxu0 0.0
        %1091 = vmatpush2.xpose.msra.mxu0 0.0
        %1092 = vmatprep.subr.mxu0 0.0
        %1093 = vmatpush2.xpose.msra.mxu0 0.0
        %1094 = vmatprep.subr.mxu0 0.0
        %1095 = vmatpush2.xpose.msra.mxu0 0.0
        %1096 = vmatprep.subr.mxu0 0.0
        %1097 = vmatpush2.xpose.msra.mxu0 0.0
        %1098 = vmatprep.subr.mxu0 0.0
        %1099 = vmatpush2.xpose.msra.mxu0 0.0
        %1100 = vmatprep.subr.mxu0 0.0
        %1101 = vmatpush2.xpose.msra.mxu0 0.0
        %1102 = vmatprep.subr.mxu0 0.0
        %1103 = vmatpush2.xpose.msra.mxu0 0.0
        %1104 = vmatprep.subr.mxu0 0.0
        %1105 = vmatpush2.xpose.msra.mxu0 0.0
        %1106 = vmatprep.subr.mxu0 0.0
        %1107 = vmatpush2.xpose.msra.mxu0 0.0
        %1108 = vmatprep.subr.mxu0 0.0
        %1109 = vmatpush2.xpose.msra.mxu0 0.0
        %1110 = vmatprep.subr.mxu0 0.0
        %1111 = vmatpush2.xpose.msra.mxu0 0.0
        %1112 = vmatprep.subr.mxu0 0.0
        %1113 = vmatpush2.xpose.msra.mxu0 0.0
        %1114 = vmatprep.subr.mxu0 0.0
        %1115 = vmatpush2.xpose.msra.mxu0 0.0
        %1116 = vmatprep.subr.mxu0 0.0
        %1117 = vmatpush2.xpose.msra.mxu0 0.0
        %1118 = vmatprep.mubr.f32.mxu0 0.0
        %1119 = vmatmul.mubr.f32.gmra.mxu0 %v1049
        %v1120 = vpop.f32.mrf.mxu0
        %v1121 = vadd.f32 0.0, %v1120
        %v1122 = vpop.f32.mrf.mxu0
        %1123 = vdwg.mxu0
        %v1125 = vsel %vm971, %v675, 0
        %v1128 = vsel %vm971, %v823, 0
        %1130 = vmatprep.subr.mxu0 0.0
        %1131 = vmatpush1.xpose.msra.mxu0 0.0
        %1132 = vmatprep.subr.mxu0 0.0
        %1133 = vmatpush1.xpose.msra.mxu0 0.0
        %1134 = vmatprep.subr.mxu0 0.0
        %1135 = vmatpush1.xpose.msra.mxu0 0.0
        %1136 = vmatprep.subr.mxu0 0.0
        %1137 = vmatpush1.xpose.msra.mxu0 0.0
        %1138 = vmatprep.subr.mxu0 0.0
        %1139 = vmatpush1.xpose.msra.mxu0 0.0
        %1140 = vmatprep.subr.mxu0 0.0
        %1141 = vmatpush1.xpose.msra.mxu0 0.0
        %1142 = vmatprep.subr.mxu0 0.0
        %1143 = vmatpush1.xpose.msra.mxu0 0.0
        %1144 = vmatprep.subr.mxu0 0.0
        %1145 = vmatpush1.xpose.msra.mxu0 0.0
        %1146 = vmatprep.subr.mxu0 0.0
        %1147 = vmatpush1.xpose.msra.mxu0 0.0
        %1148 = vmatprep.subr.mxu0 0.0
        %1149 = vmatpush1.xpose.msra.mxu0 0.0
        %1150 = vmatprep.subr.mxu0 0.0
        %1151 = vmatpush1.xpose.msra.mxu0 0.0
        %1152 = vmatprep.subr.mxu0 0.0
        %1153 = vmatpush1.xpose.msra.mxu0 0.0
        %1154 = vmatprep.subr.mxu0 0.0
        %1155 = vmatpush1.xpose.msra.mxu0 0.0
        %1156 = vmatprep.subr.mxu0 0.0
        %1157 = vmatpush1.xpose.msra.mxu0 0.0
        %1158 = vmatprep.subr.mxu0 0.0
        %1159 = vmatpush1.xpose.msra.mxu0 0.0
        %1160 = vmatprep.subr.mxu0 0.0
        %1161 = vmatpush1.xpose.msra.mxu0 %v1128
        %1162 = vmatprep.subr.mxu0 0.0
        %1163 = vmatpush2.xpose.msra.mxu0 0.0
        %1164 = vmatprep.subr.mxu0 0.0
        %1165 = vmatpush2.xpose.msra.mxu0 0.0
        %1166 = vmatprep.subr.mxu0 0.0
        %1167 = vmatpush2.xpose.msra.mxu0 0.0
        %1168 = vmatprep.subr.mxu0 0.0
        %1169 = vmatpush2.xpose.msra.mxu0 0.0
        %1170 = vmatprep.subr.mxu0 0.0
        %1171 = vmatpush2.xpose.msra.mxu0 0.0
        %1172 = vmatprep.subr.mxu0 0.0
        %1173 = vmatpush2.xpose.msra.mxu0 0.0
        %1174 = vmatprep.subr.mxu0 0.0
        %1175 = vmatpush2.xpose.msra.mxu0 0.0
        %1176 = vmatprep.subr.mxu0 0.0
        %1177 = vmatpush2.xpose.msra.mxu0 0.0
        %1178 = vmatprep.subr.mxu0 0.0
        %1179 = vmatpush2.xpose.msra.mxu0 0.0
        %1180 = vmatprep.subr.mxu0 0.0
        %1181 = vmatpush2.xpose.msra.mxu0 0.0
        %1182 = vmatprep.subr.mxu0 0.0
        %1183 = vmatpush2.xpose.msra.mxu0 0.0
        %1184 = vmatprep.subr.mxu0 0.0
        %1185 = vmatpush2.xpose.msra.mxu0 0.0
        %1186 = vmatprep.subr.mxu0 0.0
        %1187 = vmatpush2.xpose.msra.mxu0 0.0
        %1188 = vmatprep.subr.mxu0 0.0
        %1189 = vmatpush2.xpose.msra.mxu0 0.0
        %1190 = vmatprep.subr.mxu0 0.0
        %1191 = vmatpush2.xpose.msra.mxu0 0.0
        %1192 = vmatprep.subr.mxu0 0.0
        %1193 = vmatpush2.xpose.msra.mxu0 0.0
        %1194 = vmatprep.mubr.f32.mxu0 0.0
        %1195 = vmatmul.mubr.f32.gmra.mxu0 %v1125
        %v1196 = vpop.f32.mrf.mxu0
        %v1197 = vadd.f32 0.0, %v1196
        %v1198 = vpop.f32.mrf.mxu0
        %1199 = vdwg.mxu0
        %v1201 = vsel %vm971, %v676, 0
        %v1204 = vsel %vm971, %v824, 0
        %1206 = vmatprep.subr.mxu0 0.0
        %1207 = vmatpush1.xpose.msra.mxu0 0.0
        %1208 = vmatprep.subr.mxu0 0.0
        %1209 = vmatpush1.xpose.msra.mxu0 0.0
        %1210 = vmatprep.subr.mxu0 0.0
        %1211 = vmatpush1.xpose.msra.mxu0 0.0
        %1212 = vmatprep.subr.mxu0 0.0
        %1213 = vmatpush1.xpose.msra.mxu0 0.0
        %1214 = vmatprep.subr.mxu0 0.0
        %1215 = vmatpush1.xpose.msra.mxu0 0.0
        %1216 = vmatprep.subr.mxu0 0.0
        %1217 = vmatpush1.xpose.msra.mxu0 0.0
        %1218 = vmatprep.subr.mxu0 0.0
        %1219 = vmatpush1.xpose.msra.mxu0 0.0
        %1220 = vmatprep.subr.mxu0 0.0
        %1221 = vmatpush1.xpose.msra.mxu0 0.0
        %1222 = vmatprep.subr.mxu0 0.0
        %1223 = vmatpush1.xpose.msra.mxu0 0.0
        %1224 = vmatprep.subr.mxu0 0.0
        %1225 = vmatpush1.xpose.msra.mxu0 0.0
        %1226 = vmatprep.subr.mxu0 0.0
        %1227 = vmatpush1.xpose.msra.mxu0 0.0
        %1228 = vmatprep.subr.mxu0 0.0
        %1229 = vmatpush1.xpose.msra.mxu0 0.0
        %1230 = vmatprep.subr.mxu0 0.0
        %1231 = vmatpush1.xpose.msra.mxu0 0.0
        %1232 = vmatprep.subr.mxu0 0.0
        %1233 = vmatpush1.xpose.msra.mxu0 0.0
        %1234 = vmatprep.subr.mxu0 0.0
        %1235 = vmatpush1.xpose.msra.mxu0 0.0
        %1236 = vmatprep.subr.mxu0 0.0
        %1237 = vmatpush1.xpose.msra.mxu0 %v1204
        %1238 = vmatprep.subr.mxu0 0.0
        %1239 = vmatpush2.xpose.msra.mxu0 0.0
        %1240 = vmatprep.subr.mxu0 0.0
        %1241 = vmatpush2.xpose.msra.mxu0 0.0
        %1242 = vmatprep.subr.mxu0 0.0
        %1243 = vmatpush2.xpose.msra.mxu0 0.0
        %1244 = vmatprep.subr.mxu0 0.0
        %1245 = vmatpush2.xpose.msra.mxu0 0.0
        %1246 = vmatprep.subr.mxu0 0.0
        %1247 = vmatpush2.xpose.msra.mxu0 0.0
        %1248 = vmatprep.subr.mxu0 0.0
        %1249 = vmatpush2.xpose.msra.mxu0 0.0
        %1250 = vmatprep.subr.mxu0 0.0
        %1251 = vmatpush2.xpose.msra.mxu0 0.0
        %1252 = vmatprep.subr.mxu0 0.0
        %1253 = vmatpush2.xpose.msra.mxu0 0.0
        %1254 = vmatprep.subr.mxu0 0.0
        %1255 = vmatpush2.xpose.msra.mxu0 0.0
        %1256 = vmatprep.subr.mxu0 0.0
        %1257 = vmatpush2.xpose.msra.mxu0 0.0
        %1258 = vmatprep.subr.mxu0 0.0
        %1259 = vmatpush2.xpose.msra.mxu0 0.0
        %1260 = vmatprep.subr.mxu0 0.0
        %1261 = vmatpush2.xpose.msra.mxu0 0.0
        %1262 = vmatprep.subr.mxu0 0.0
        %1263 = vmatpush2.xpose.msra.mxu0 0.0
        %1264 = vmatprep.subr.mxu0 0.0
        %1265 = vmatpush2.xpose.msra.mxu0 0.0
        %1266 = vmatprep.subr.mxu0 0.0
        %1267 = vmatpush2.xpose.msra.mxu0 0.0
        %1268 = vmatprep.subr.mxu0 0.0
        %1269 = vmatpush2.xpose.msra.mxu0 0.0
        %1270 = vmatprep.mubr.f32.mxu0 0.0
        %1271 = vmatmul.mubr.f32.gmra.mxu0 %v1201
        %v1272 = vpop.f32.mrf.mxu0
        %v1273 = vadd.f32 0.0, %v1272
        %v1274 = vpop.f32.mrf.mxu0
        %1275 = vdwg.mxu0
        %vm1276 = vcmask 64512
        %v1277 = vsel %vm1276, %v1045, -inf
        %1278 = vmax.xlane.f32.xlu0 %v1277
        %v1279 = vpop.xlane.xlu0 %1278
        %v1280 = vsel %vm1276, %v1121, -inf
        %1281 = vmax.xlane.f32.xlu0 %v1280
        %v1282 = vpop.xlane.xlu0 %1281
        %v1283 = vsel %vm1276, %v1197, -inf
        %1284 = vmax.xlane.f32.xlu0 %v1283
        %v1285 = vpop.xlane.xlu0 %1284
        %v1286 = vsel %vm1276, %v1273, -inf
        %1287 = vmax.xlane.f32.xlu0 %v1286
        %v1288 = vpop.xlane.xlu0 %1287
        %v1289 = vsub.f32 %v1045, %v1279
        %v1290 = vsub.f32 %v1121, %v1282
        %v1291 = vsub.f32 %v1197, %v1285
        %v1292 = vsub.f32 %v1273, %v1288
        %v1293 = vmul.f32 %v1289, 1.442695
        %v1294 = vpow.pop %v1293
        %v1295 = vmul.f32 %v1290, 1.442695
        %v1296 = vpow.pop %v1295
        %v1297 = vmul.f32 %v1291, 1.442695
        %v1298 = vpow.pop %v1297
        %v1299 = vmul.f32 %v1292, 1.442695
        %v1300 = vpow.pop %v1299
        %v1301 = vsel %vm1276, %v1294, 0.0
        %1302 = vadd.xlane.f32.xlu0 %v1301
        %v1303 = vpop.xlane.xlu0 %1302
        %v1304 = vsel %vm1276, %v1296, 0.0
        %1305 = vadd.xlane.f32.xlu0 %v1304
        %v1306 = vpop.xlane.xlu0 %1305
        %v1307 = vsel %vm1276, %v1298, 0.0
        %1308 = vadd.xlane.f32.xlu0 %v1307
        %v1309 = vpop.xlane.xlu0 %1308
        %v1310 = vsel %vm1276, %v1300, 0.0
        %1311 = vadd.xlane.f32.xlu0 %v1310
        %v1312 = vpop.xlane.xlu0 %1311
        %v1313 = vrcp.pop %v1303
        %v1314 = vrcp.pop %v1306
        %v1315 = vrcp.pop %v1309
        %v1316 = vrcp.pop %v1312
        %v1317 = vmul.f32 %v1294, %v1313
        %v1318 = vmul.f32 %v1296, %v1314
        %v1319 = vmul.f32 %v1298, %v1315
        %v1320 = vmul.f32 %v1300, %v1316
        %v1322 = vsel %vm1276, %v1317, 0
        %1324 = vmatprep.subr.mxu0 0.0
        %1325 = vmatpush1.msra.mxu0 0.0
        %1326 = vmatprep.subr.mxu0 0.0
        %1327 = vmatpush1.msra.mxu0 0.0
        %1328 = vmatprep.subr.mxu0 0.0
        %1329 = vmatpush1.msra.mxu0 0.0
        %1330 = vmatprep.subr.mxu0 0.0
        %1331 = vmatpush1.msra.mxu0 0.0
        %1332 = vmatprep.subr.mxu0 0.0
        %1333 = vmatpush1.msra.mxu0 0.0
        %1334 = vmatprep.subr.mxu0 0.0
        %1335 = vmatpush1.msra.mxu0 0.0
        %1336 = vmatprep.subr.mxu0 0.0
        %1337 = vmatpush1.msra.mxu0 0.0
        %1338 = vmatprep.subr.mxu0 0.0
        %1339 = vmatpush1.msra.mxu0 0.0
        %1340 = vmatprep.subr.mxu0 0.0
        %1341 = vmatpush1.msra.mxu0 0.0
        %1342 = vmatprep.subr.mxu0 0.0
        %1343 = vmatpush1.msra.mxu0 0.0
        %1344 = vmatprep.subr.mxu0 0.0
        %1345 = vmatpush1.msra.mxu0 0.0
        %1346 = vmatprep.subr.mxu0 0.0
        %1347 = vmatpush1.msra.mxu0 0.0
        %1348 = vmatprep.subr.mxu0 0.0
        %1349 = vmatpush1.msra.mxu0 0.0
        %1350 = vmatprep.subr.mxu0 0.0
        %1351 = vmatpush1.msra.mxu0 0.0
        %1352 = vmatprep.subr.mxu0 0.0
        %1353 = vmatpush1.msra.mxu0 0.0
        %1354 = vmatprep.subr.mxu0 0.0
        %1355 = vmatpush1.msra.mxu0 %v967
        %1356 = vmatprep.subr.mxu0 0.0
        %1357 = vmatpush2.msra.mxu0 0.0
        %1358 = vmatprep.subr.mxu0 0.0
        %1359 = vmatpush2.msra.mxu0 0.0
        %1360 = vmatprep.subr.mxu0 0.0
        %1361 = vmatpush2.msra.mxu0 0.0
        %1362 = vmatprep.subr.mxu0 0.0
        %1363 = vmatpush2.msra.mxu0 0.0
        %1364 = vmatprep.subr.mxu0 0.0
        %1365 = vmatpush2.msra.mxu0 0.0
        %1366 = vmatprep.subr.mxu0 0.0
        %1367 = vmatpush2.msra.mxu0 0.0
        %1368 = vmatprep.subr.mxu0 0.0
        %1369 = vmatpush2.msra.mxu0 0.0
        %1370 = vmatprep.subr.mxu0 0.0
        %1371 = vmatpush2.msra.mxu0 0.0
        %1372 = vmatprep.subr.mxu0 0.0
        %1373 = vmatpush2.msra.mxu0 0.0
        %1374 = vmatprep.subr.mxu0 0.0
        %1375 = vmatpush2.msra.mxu0 0.0
        %1376 = vmatprep.subr.mxu0 0.0
        %1377 = vmatpush2.msra.mxu0 0.0
        %1378 = vmatprep.subr.mxu0 0.0
        %1379 = vmatpush2.msra.mxu0 0.0
        %1380 = vmatprep.subr.mxu0 0.0
        %1381 = vmatpush2.msra.mxu0 0.0
        %1382 = vmatprep.subr.mxu0 0.0
        %1383 = vmatpush2.msra.mxu0 0.0
        %1384 = vmatprep.subr.mxu0 0.0
        %1385 = vmatpush2.msra.mxu0 0.0
        %1386 = vmatprep.subr.mxu0 0.0
        %1387 = vmatpush2.msra.mxu0 0.0
        %1388 = vmatprep.mubr.f32.mxu0 0.0
        %1389 = vmatmul.mubr.f32.gmra.mxu0 %v1322
        %v1390 = vpop.f32.mrf.mxu0
        %v1391 = vadd.f32 0.0, %v1390
        %v1392 = vpop.f32.mrf.mxu0
        %1393 = vdwg.mxu0
        %v1395 = vsel %vm1276, %v1318, 0
        %1397 = vmatprep.subr.mxu0 0.0
        %1398 = vmatpush1.msra.mxu0 0.0
        %1399 = vmatprep.subr.mxu0 0.0
        %1400 = vmatpush1.msra.mxu0 0.0
        %1401 = vmatprep.subr.mxu0 0.0
        %1402 = vmatpush1.msra.mxu0 0.0
        %1403 = vmatprep.subr.mxu0 0.0
        %1404 = vmatpush1.msra.mxu0 0.0
        %1405 = vmatprep.subr.mxu0 0.0
        %1406 = vmatpush1.msra.mxu0 0.0
        %1407 = vmatprep.subr.mxu0 0.0
        %1408 = vmatpush1.msra.mxu0 0.0
        %1409 = vmatprep.subr.mxu0 0.0
        %1410 = vmatpush1.msra.mxu0 0.0
        %1411 = vmatprep.subr.mxu0 0.0
        %1412 = vmatpush1.msra.mxu0 0.0
        %1413 = vmatprep.subr.mxu0 0.0
        %1414 = vmatpush1.msra.mxu0 0.0
        %1415 = vmatprep.subr.mxu0 0.0
        %1416 = vmatpush1.msra.mxu0 0.0
        %1417 = vmatprep.subr.mxu0 0.0
        %1418 = vmatpush1.msra.mxu0 0.0
        %1419 = vmatprep.subr.mxu0 0.0
        %1420 = vmatpush1.msra.mxu0 0.0
        %1421 = vmatprep.subr.mxu0 0.0
        %1422 = vmatpush1.msra.mxu0 0.0
        %1423 = vmatprep.subr.mxu0 0.0
        %1424 = vmatpush1.msra.mxu0 0.0
        %1425 = vmatprep.subr.mxu0 0.0
        %1426 = vmatpush1.msra.mxu0 0.0
        %1427 = vmatprep.subr.mxu0 0.0
        %1428 = vmatpush1.msra.mxu0 %v968
        %1429 = vmatprep.subr.mxu0 0.0
        %1430 = vmatpush2.msra.mxu0 0.0
        %1431 = vmatprep.subr.mxu0 0.0
        %1432 = vmatpush2.msra.mxu0 0.0
        %1433 = vmatprep.subr.mxu0 0.0
        %1434 = vmatpush2.msra.mxu0 0.0
        %1435 = vmatprep.subr.mxu0 0.0
        %1436 = vmatpush2.msra.mxu0 0.0
        %1437 = vmatprep.subr.mxu0 0.0
        %1438 = vmatpush2.msra.mxu0 0.0
        %1439 = vmatprep.subr.mxu0 0.0
        %1440 = vmatpush2.msra.mxu0 0.0
        %1441 = vmatprep.subr.mxu0 0.0
        %1442 = vmatpush2.msra.mxu0 0.0
        %1443 = vmatprep.subr.mxu0 0.0
        %1444 = vmatpush2.msra.mxu0 0.0
        %1445 = vmatprep.subr.mxu0 0.0
        %1446 = vmatpush2.msra.mxu0 0.0
        %1447 = vmatprep.subr.mxu0 0.0
        %1448 = vmatpush2.msra.mxu0 0.0
        %1449 = vmatprep.subr.mxu0 0.0
        %1450 = vmatpush2.msra.mxu0 0.0
        %1451 = vmatprep.subr.mxu0 0.0
        %1452 = vmatpush2.msra.mxu0 0.0
        %1453 = vmatprep.subr.mxu0 0.0
        %1454 = vmatpush2.msra.mxu0 0.0
        %1455 = vmatprep.subr.mxu0 0.0
        %1456 = vmatpush2.msra.mxu0 0.0
        %1457 = vmatprep.subr.mxu0 0.0
        %1458 = vmatpush2.msra.mxu0 0.0
        %1459 = vmatprep.subr.mxu0 0.0
        %1460 = vmatpush2.msra.mxu0 0.0
        %1461 = vmatprep.mubr.f32.mxu0 0.0
        %1462 = vmatmul.mubr.f32.gmra.mxu0 %v1395
        %v1463 = vpop.f32.mrf.mxu0
        %v1464 = vadd.f32 0.0, %v1463
        %v1465 = vpop.f32.mrf.mxu0
        %1466 = vdwg.mxu0
        %v1468 = vsel %vm1276, %v1319, 0
        %1470 = vmatprep.subr.mxu0 0.0
        %1471 = vmatpush1.msra.mxu0 0.0
        %1472 = vmatprep.subr.mxu0 0.0
        %1473 = vmatpush1.msra.mxu0 0.0
        %1474 = vmatprep.subr.mxu0 0.0
        %1475 = vmatpush1.msra.mxu0 0.0
        %1476 = vmatprep.subr.mxu0 0.0
        %1477 = vmatpush1.msra.mxu0 0.0
        %1478 = vmatprep.subr.mxu0 0.0
        %1479 = vmatpush1.msra.mxu0 0.0
        %1480 = vmatprep.subr.mxu0 0.0
        %1481 = vmatpush1.msra.mxu0 0.0
        %1482 = vmatprep.subr.mxu0 0.0
        %1483 = vmatpush1.msra.mxu0 0.0
        %1484 = vmatprep.subr.mxu0 0.0
        %1485 = vmatpush1.msra.mxu0 0.0
        %1486 = vmatprep.subr.mxu0 0.0
        %1487 = vmatpush1.msra.mxu0 0.0
        %1488 = vmatprep.subr.mxu0 0.0
        %1489 = vmatpush1.msra.mxu0 0.0
        %1490 = vmatprep.subr.mxu0 0.0
        %1491 = vmatpush1.msra.mxu0 0.0
        %1492 = vmatprep.subr.mxu0 0.0
        %1493 = vmatpush1.msra.mxu0 0.0
        %1494 = vmatprep.subr.mxu0 0.0
        %1495 = vmatpush1.msra.mxu0 0.0
        %1496 = vmatprep.subr.mxu0 0.0
        %1497 = vmatpush1.msra.mxu0 0.0
        %1498 = vmatprep.subr.mxu0 0.0
        %1499 = vmatpush1.msra.mxu0 0.0
        %1500 = vmatprep.subr.mxu0 0.0
        %1501 = vmatpush1.msra.mxu0 %v969
        %1502 = vmatprep.subr.mxu0 0.0
        %1503 = vmatpush2.msra.mxu0 0.0
        %1504 = vmatprep.subr.mxu0 0.0
        %1505 = vmatpush2.msra.mxu0 0.0
        %1506 = vmatprep.subr.mxu0 0.0
        %1507 = vmatpush2.msra.mxu0 0.0
        %1508 = vmatprep.subr.mxu0 0.0
        %1509 = vmatpush2.msra.mxu0 0.0
        %1510 = vmatprep.subr.mxu0 0.0
        %1511 = vmatpush2.msra.mxu0 0.0
        %1512 = vmatprep.subr.mxu0 0.0
        %1513 = vmatpush2.msra.mxu0 0.0
        %1514 = vmatprep.subr.mxu0 0.0
        %1515 = vmatpush2.msra.mxu0 0.0
        %1516 = vmatprep.subr.mxu0 0.0
        %1517 = vmatpush2.msra.mxu0 0.0
        %1518 = vmatprep.subr.mxu0 0.0
        %1519 = vmatpush2.msra.mxu0 0.0
        %1520 = vmatprep.subr.mxu0 0.0
        %1521 = vmatpush2.msra.mxu0 0.0
        %1522 = vmatprep.subr.mxu0 0.0
        %1523 = vmatpush2.msra.mxu0 0.0
        %1524 = vmatprep.subr.mxu0 0.0
        %1525 = vmatpush2.msra.mxu0 0.0
        %1526 = vmatprep.subr.mxu0 0.0
        %1527 = vmatpush2.msra.mxu0 0.0
        %1528 = vmatprep.subr.mxu0 0.0
        %1529 = vmatpush2.msra.mxu0 0.0
        %1530 = vmatprep.subr.mxu0 0.0
        %1531 = vmatpush2.msra.mxu0 0.0
        %1532 = vmatprep.subr.mxu0 0.0
        %1533 = vmatpush2.msra.mxu0 0.0
        %1534 = vmatprep.mubr.f32.mxu0 0.0
        %1535 = vmatmul.mubr.f32.gmra.mxu0 %v1468
        %v1536 = vpop.f32.mrf.mxu0
        %v1537 = vadd.f32 0.0, %v1536
        %v1538 = vpop.f32.mrf.mxu0
        %1539 = vdwg.mxu0
        %v1541 = vsel %vm1276, %v1320, 0
        %1543 = vmatprep.subr.mxu0 0.0
        %1544 = vmatpush1.msra.mxu0 0.0
        %1545 = vmatprep.subr.mxu0 0.0
        %1546 = vmatpush1.msra.mxu0 0.0
        %1547 = vmatprep.subr.mxu0 0.0
        %1548 = vmatpush1.msra.mxu0 0.0
        %1549 = vmatprep.subr.mxu0 0.0
        %1550 = vmatpush1.msra.mxu0 0.0
        %1551 = vmatprep.subr.mxu0 0.0
        %1552 = vmatpush1.msra.mxu0 0.0
        %1553 = vmatprep.subr.mxu0 0.0
        %1554 = vmatpush1.msra.mxu0 0.0
        %1555 = vmatprep.subr.mxu0 0.0
        %1556 = vmatpush1.msra.mxu0 0.0
        %1557 = vmatprep.subr.mxu0 0.0
        %1558 = vmatpush1.msra.mxu0 0.0
        %1559 = vmatprep.subr.mxu0 0.0
        %1560 = vmatpush1.msra.mxu0 0.0
        %1561 = vmatprep.subr.mxu0 0.0
        %1562 = vmatpush1.msra.mxu0 0.0
        %1563 = vmatprep.subr.mxu0 0.0
        %1564 = vmatpush1.msra.mxu0 0.0
        %1565 = vmatprep.subr.mxu0 0.0
        %1566 = vmatpush1.msra.mxu0 0.0
        %1567 = vmatprep.subr.mxu0 0.0
        %1568 = vmatpush1.msra.mxu0 0.0
        %1569 = vmatprep.subr.mxu0 0.0
        %1570 = vmatpush1.msra.mxu0 0.0
        %1571 = vmatprep.subr.mxu0 0.0
        %1572 = vmatpush1.msra.mxu0 0.0
        %1573 = vmatprep.subr.mxu0 0.0
        %1574 = vmatpush1.msra.mxu0 %v970
        %1575 = vmatprep.subr.mxu0 0.0
        %1576 = vmatpush2.msra.mxu0 0.0
        %1577 = vmatprep.subr.mxu0 0.0
        %1578 = vmatpush2.msra.mxu0 0.0
        %1579 = vmatprep.subr.mxu0 0.0
        %1580 = vmatpush2.msra.mxu0 0.0
        %1581 = vmatprep.subr.mxu0 0.0
        %1582 = vmatpush2.msra.mxu0 0.0
        %1583 = vmatprep.subr.mxu0 0.0
        %1584 = vmatpush2.msra.mxu0 0.0
        %1585 = vmatprep.subr.mxu0 0.0
        %1586 = vmatpush2.msra.mxu0 0.0
        %1587 = vmatprep.subr.mxu0 0.0
        %1588 = vmatpush2.msra.mxu0 0.0
        %1589 = vmatprep.subr.mxu0 0.0
        %1590 = vmatpush2.msra.mxu0 0.0
        %1591 = vmatprep.subr.mxu0 0.0
        %1592 = vmatpush2.msra.mxu0 0.0
        %1593 = vmatprep.subr.mxu0 0.0
        %1594 = vmatpush2.msra.mxu0 0.0
        %1595 = vmatprep.subr.mxu0 0.0
        %1596 = vmatpush2.msra.mxu0 0.0
        %1597 = vmatprep.subr.mxu0 0.0
        %1598 = vmatpush2.msra.mxu0 0.0
        %1599 = vmatprep.subr.mxu0 0.0
        %1600 = vmatpush2.msra.mxu0 0.0
        %1601 = vmatprep.subr.mxu0 0.0
        %1602 = vmatpush2.msra.mxu0 0.0
        %1603 = vmatprep.subr.mxu0 0.0
        %1604 = vmatpush2.msra.mxu0 0.0
        %1605 = vmatprep.subr.mxu0 0.0
        %1606 = vmatpush2.msra.mxu0 0.0
        %1607 = vmatprep.mubr.f32.mxu0 0.0
        %1608 = vmatmul.mubr.f32.gmra.mxu0 %v1541
        %v1609 = vpop.f32.mrf.mxu0
        %v1610 = vadd.f32 0.0, %v1609
        %v1611 = vpop.f32.mrf.mxu0
        %1612 = vdwg.mxu0
        %v1613 = vcombine.low %v1391, %v1537
        %v1614 = vcombine.high %v1391, %v1537
        %v1616 = vunpack.c.l.s4 1983009808
        %v1617 = vunpack.c.0.s8 %v1616
        %v1618 = vlaneseq
        %v1619 = vshrl.u32 %v1618, 7
        %v1620 = vsub.s32 %v1617, %v1619
        %v1621 = vrot.slane %v1613, %v1620
        %v1623 = vunpack.c.l.s4 1983009808
        %v1624 = vunpack.c.0.s8 %v1623
        %v1625 = vlaneseq
        %v1626 = vshrl.u32 %v1625, 7
        %v1627 = vsub.s32 %v1624, %v1626
        %v1628 = vrot.slane %v1614, %v1627
        %v1629 = vcombine.low %v1464, %v1610
        %v1630 = vcombine.high %v1464, %v1610
        %v1632 = vunpack.c.l.s4 1983009808
        %v1633 = vunpack.c.0.s8 %v1632
        %v1634 = vlaneseq
        %v1635 = vshrl.u32 %v1634, 7
        %v1636 = vsub.s32 %v1633, %v1635
        %v1637 = vrot.slane %v1629, %v1636
        %v1639 = vunpack.c.l.s4 1983009808
        %v1640 = vunpack.c.0.s8 %v1639
        %v1641 = vlaneseq
        %v1642 = vshrl.u32 %v1641, 7
        %v1643 = vsub.s32 %v1640, %v1642
        %v1644 = vrot.slane %v1630, %v1643
        %v1645 = vcombine.low %v1621, %v1637
        %v1646 = vcombine.high %v1621, %v1637
        %v1648 = vunpack.c.l.s4 1934713408
        %v1649 = vunpack.c.0.s8 %v1648
        %v1650 = vlaneseq
        %v1651 = vshrl.u32 %v1650, 7
        %v1652 = vsub.s32 %v1649, %v1651
        %v1653 = vrot.slane %v1645, %v1652
        %v1655 = vunpack.c.l.s4 1934713408
        %v1656 = vunpack.c.0.s8 %v1655
        %v1657 = vlaneseq
        %v1658 = vshrl.u32 %v1657, 7
        %v1659 = vsub.s32 %v1656, %v1658
        %v1660 = vrot.slane %v1646, %v1659
        %v1661 = vcombine.low %v1628, %v1644
        %v1662 = vcombine.high %v1628, %v1644
        %v1664 = vunpack.c.l.s4 1934713408
        %v1665 = vunpack.c.0.s8 %v1664
        %v1666 = vlaneseq
        %v1667 = vshrl.u32 %v1666, 7
        %v1668 = vsub.s32 %v1665, %v1667
        %v1669 = vrot.slane %v1661, %v1668
        %v1671 = vunpack.c.l.s4 1934713408
        %v1672 = vunpack.c.0.s8 %v1671
        %v1673 = vlaneseq
        %v1674 = vshrl.u32 %v1673, 7
        %v1675 = vsub.s32 %v1672, %v1674
        %v1676 = vrot.slane %v1662, %v1675
        %v1677 = vcombine.high %v1653, 0.0
        %v1678 = vcombine.high %v1660, 0.0
        %v1679 = vcombine.high %v1669, 0.0
        %v1680 = vcombine.high %v1676, 0.0
        %v1681 = vcombine.low %v1653, %v1660
        %v1683 = vunpack.c.l.s4 1983009808
        %v1684 = vunpack.c.0.s8 %v1683
        %v1685 = vlaneseq
        %v1686 = vshrl.u32 %v1685, 7
        %v1687 = vsub.s32 %v1684, %v1686
        %v1688 = vrot.slane %v1681, %v1687
        %v1689 = vcombine.low %v1677, %v1678
        %v1691 = vunpack.c.l.s4 1983009808
        %v1692 = vunpack.c.0.s8 %v1691
        %v1693 = vlaneseq
        %v1694 = vshrl.u32 %v1693, 7
        %v1695 = vsub.s32 %v1692, %v1694
        %v1696 = vrot.slane %v1689, %v1695
        %v1697 = vcombine.low %v1669, %v1676
        %v1699 = vunpack.c.l.s4 1983009808
        %v1700 = vunpack.c.0.s8 %v1699
        %v1701 = vlaneseq
        %v1702 = vshrl.u32 %v1701, 7
        %v1703 = vsub.s32 %v1700, %v1702
        %v1704 = vrot.slane %v1697, %v1703
        %v1705 = vcombine.low %v1679, %v1680
        %v1707 = vunpack.c.l.s4 1983009808
        %v1708 = vunpack.c.0.s8 %v1707
        %v1709 = vlaneseq
        %v1710 = vshrl.u32 %v1709, 7
        %v1711 = vsub.s32 %v1708, %v1710
        %v1712 = vrot.slane %v1705, %v1711
        %v1713 = vcombine.low %v1688, %v1696
        %v1714 = vcombine.high %v1688, %v1696
        %v1716 = vunpack.c.l.s4 1934713408
        %v1717 = vunpack.c.0.s8 %v1716
        %v1718 = vlaneseq
        %v1719 = vshrl.u32 %v1718, 7
        %v1720 = vsub.s32 %v1717, %v1719
        %v1721 = vrot.slane %v1713, %v1720
        %v1723 = vunpack.c.l.s4 1934713408
        %v1724 = vunpack.c.0.s8 %v1723
        %v1725 = vlaneseq
        %v1726 = vshrl.u32 %v1725, 7
        %v1727 = vsub.s32 %v1724, %v1726
        %v1728 = vrot.slane %v1714, %v1727
        %v1729 = vcombine.low %v1704, %v1712
        %v1730 = vcombine.high %v1704, %v1712
        %v1732 = vunpack.c.l.s4 1934713408
        %v1733 = vunpack.c.0.s8 %v1732
        %v1734 = vlaneseq
        %v1735 = vshrl.u32 %v1734, 7
        %v1736 = vsub.s32 %v1733, %v1735
        %v1737 = vrot.slane %v1729, %v1736
        %v1739 = vunpack.c.l.s4 1934713408
        %v1740 = vunpack.c.0.s8 %v1739
        %v1741 = vlaneseq
        %v1742 = vshrl.u32 %v1741, 7
        %v1743 = vsub.s32 %v1740, %v1742
        %v1744 = vrot.slane %v1730, %v1743
        %v1745 = vcombine.low %v1721, %v1737
        %v1746 = vcombine.high %v1721, %v1737
        %v1747 = vcombine.low %v1728, %v1744
        %v1748 = vcombine.high %v1728, %v1744
        %1750 = vrot.lane.b32.xlu0 %v1746, 16
        %v1751 = vpop.permute.xlu0 %1750
        %1754 = vrot.lane.b32.xlu0 %v1747, 32
        %v1755 = vpop.permute.xlu0 %1754
        %1758 = vrot.lane.b32.xlu0 %v1748, 48
        %v1759 = vpop.permute.xlu0 %1758
        %v1761 = vsel %vm971, %v1745, %v1751
        %vm1762 = vcmask 261120
        %v1763 = vsel %vm1762, %v1761, %v1755
        %vm1764 = vcmask 392192
        %v1765 = vsel %vm1764, %v1763, %v1759
        %v1766 = vld [vmem:[%s4] sm:$0xff]
        %v1767 = vld [vmem:[%s4 + $0x8] sm:$0xff]
        %v1768 = vld [vmem:[%s4 + $0x10] sm:$0xff]
        %v1769 = vld [vmem:[%s4 + $0x18] sm:$0xff]
        %v1770 = vld [vmem:[%s4 + $0x20] sm:$0xff]
        %v1771 = vld [vmem:[%s4 + $0x28] sm:$0xff]
        %v1772 = vld [vmem:[%s4 + $0x30] sm:$0xff]
        %v1773 = vld [vmem:[%s4 + $0x38] sm:$0xff]
        %v1774 = vld [vmem:[%s5] sm:$0x1]
        %v1776 = vlaneseq
        %v1777 = vshrl.u32 %v1776, 7
        %v1778 = vsub.s32 0, %v1777
        %v1779 = vrot.slane %v1774, %v1778
        %v1782 = vsel %vm412, %v1765, 0
        %1784 = vmatprep.subr.mxu0 0.0
        %1785 = vmatpush1.msra.mxu0 0.0
        %1786 = vmatprep.subr.mxu0 0.0
        %1787 = vmatpush1.msra.mxu0 0.0
        %1788 = vmatprep.subr.mxu0 0.0
        %1789 = vmatpush1.msra.mxu0 0.0
        %1790 = vmatprep.subr.mxu0 0.0
        %1791 = vmatpush1.msra.mxu0 0.0
        %1792 = vmatprep.subr.mxu0 0.0
        %1793 = vmatpush1.msra.mxu0 0.0
        %1794 = vmatprep.subr.mxu0 0.0
        %1795 = vmatpush1.msra.mxu0 0.0
        %1796 = vmatprep.subr.mxu0 0.0
        %1797 = vmatpush1.msra.mxu0 0.0
        %1798 = vmatprep.subr.mxu0 0.0
        %1799 = vmatpush1.msra.mxu0 0.0
        %1800 = vmatprep.subr.mxu0 0.0
        %1801 = vmatpush1.msra.mxu0 %v1773
        %1802 = vmatprep.subr.mxu0 0.0
        %1803 = vmatpush1.msra.mxu0 %v1772
        %1804 = vmatprep.subr.mxu0 0.0
        %1805 = vmatpush1.msra.mxu0 %v1771
        %1806 = vmatprep.subr.mxu0 0.0
        %1807 = vmatpush1.msra.mxu0 %v1770
        %1808 = vmatprep.subr.mxu0 0.0
        %1809 = vmatpush1.msra.mxu0 %v1769
        %1810 = vmatprep.subr.mxu0 0.0
        %1811 = vmatpush1.msra.mxu0 %v1768
        %1812 = vmatprep.subr.mxu0 0.0
        %1813 = vmatpush1.msra.mxu0 %v1767
        %1814 = vmatprep.subr.mxu0 0.0
        %1815 = vmatpush1.msra.mxu0 %v1766
        %1816 = vmatprep.subr.mxu0 0.0
        %1817 = vmatpush2.msra.mxu0 0.0
        %1818 = vmatprep.subr.mxu0 0.0
        %1819 = vmatpush2.msra.mxu0 0.0
        %1820 = vmatprep.subr.mxu0 0.0
        %1821 = vmatpush2.msra.mxu0 0.0
        %1822 = vmatprep.subr.mxu0 0.0
        %1823 = vmatpush2.msra.mxu0 0.0
        %1824 = vmatprep.subr.mxu0 0.0
        %1825 = vmatpush2.msra.mxu0 0.0
        %1826 = vmatprep.subr.mxu0 0.0
        %1827 = vmatpush2.msra.mxu0 0.0
        %1828 = vmatprep.subr.mxu0 0.0
        %1829 = vmatpush2.msra.mxu0 0.0
        %1830 = vmatprep.subr.mxu0 0.0
        %1831 = vmatpush2.msra.mxu0 0.0
        %1832 = vmatprep.subr.mxu0 0.0
        %1833 = vmatpush2.msra.mxu0 0.0
        %1834 = vmatprep.subr.mxu0 0.0
        %1835 = vmatpush2.msra.mxu0 0.0
        %1836 = vmatprep.subr.mxu0 0.0
        %1837 = vmatpush2.msra.mxu0 0.0
        %1838 = vmatprep.subr.mxu0 0.0
        %1839 = vmatpush2.msra.mxu0 0.0
        %1840 = vmatprep.subr.mxu0 0.0
        %1841 = vmatpush2.msra.mxu0 0.0
        %1842 = vmatprep.subr.mxu0 0.0
        %1843 = vmatpush2.msra.mxu0 0.0
        %1844 = vmatprep.subr.mxu0 0.0
        %1845 = vmatpush2.msra.mxu0 0.0
        %1846 = vmatprep.subr.mxu0 0.0
        %1847 = vmatpush2.msra.mxu0 0.0
        %1848 = vmatprep.mubr.f32.mxu0 0.0
        %1849 = vmatmul.mubr.f32.gmra.mxu0 %v1782
        %v1850 = vpop.f32.mrf.mxu0
        %v1851 = vadd.f32 %v1779, %v1850
        %v1852 = vpop.f32.mrf.mxu0
        %1853 = vdwg.mxu0
        %v1854 = vadd.f32 %v409, %v1851
        %v1855 = vld [vmem:[%s6] sm:$0x1]
        %v1856 = vld [vmem:[%s7] sm:$0x1]
        %v1857 = vsel %vm412, %v1854, 0.0
        %1858 = vadd.xlane.f32.xlu0 %v1857
        %v1859 = vpop.xlane.xlu0 %1858
        %v1860 = vmul.f32 %v1859, %v416
        %v1861 = vsub.f32 %v1854, %v1860
        %v1862 = vmul.f32 %v1861, %v1861
        %v1863 = vsel %vm412, %v1862, 0.0
        %1864 = vadd.xlane.f32.xlu0 %v1863
        %v1865 = vpop.xlane.xlu0 %1864
        %v1866 = vmul.f32 %v1865, %v416
        %v1867 = vadd.f32 %v1866, 1e-05
        %v1868 = vrsqrt.pop %v1867
        %v1869 = vmul.f32 %v1861, %v1868
        %v1871 = vlaneseq
        %v1872 = vshrl.u32 %v1871, 7
        %v1873 = vsub.s32 0, %v1872
        %v1874 = vrot.slane %v1855, %v1873
        %v1876 = vmul.f32 %v1869, %v1874
        %v1878 = vlaneseq
        %v1879 = vshrl.u32 %v1878, 7
        %v1880 = vsub.s32 0, %v1879
        %v1881 = vrot.slane %v1856, %v1880
        %v1883 = vadd.f32 %v1876, %v1881
        %v1884 = vld [vmem:[%s8] sm:$0xff]
        %v1885 = vld [vmem:[%s8 + $0x8] sm:$0xff]
        %v1886 = vld [vmem:[%s8 + $0x10] sm:$0xff]
        %v1887 = vld [vmem:[%s8 + $0x18] sm:$0xff]
        %v1888 = vld [vmem:[%s8 + $0x20] sm:$0xff]
        %v1889 = vld [vmem:[%s8 + $0x28] sm:$0xff]
        %v1890 = vld [vmem:[%s8 + $0x30] sm:$0xff]
        %v1891 = vld [vmem:[%s8 + $0x38] sm:$0xff]
        %v1892 = vld [vmem:[%s8 + $0x40] sm:$0xff]
        %v1893 = vld [vmem:[%s8 + $0x48] sm:$0xff]
        %v1894 = vld [vmem:[%s8 + $0x50] sm:$0xff]
        %v1895 = vld [vmem:[%s8 + $0x58] sm:$0xff]
        %v1896 = vld [vmem:[%s8 + $0x60] sm:$0xff]
        %v1897 = vld [vmem:[%s8 + $0x68] sm:$0xff]
        %v1898 = vld [vmem:[%s8 + $0x70] sm:$0xff]
        %v1899 = vld [vmem:[%s8 + $0x78] sm:$0xff]
        %v1900 = vld [vmem:[%s9] sm:$0x3]
        %v1902 = vlaneseq
        %v1903 = vshrl.u32 %v1902, 7
        %v1904 = vsub.s32 0, %v1903
        %v1905 = vrot.slane %v1900, %v1904
        %v1906 = vlaneseq
        %v1907 = vshrl.u32 %v1906, 7
        %v1908 = vsub.s32 1, %v1907
        %v1909 = vrot.slane %v1900, %v1908
        %v1913 = vsel %vm412, %v1883, 0
        %1915 = vmatprep.subr.mxu0 0.0
        %1916 = vmatpush1.msra.mxu0 0.0
        %1917 = vmatprep.subr.mxu0 0.0
        %1918 = vmatpush1.msra.mxu0 0.0
        %1919 = vmatprep.subr.mxu0 0.0
        %1920 = vmatpush1.msra.mxu0 0.0
        %1921 = vmatprep.subr.mxu0 0.0
        %1922 = vmatpush1.msra.mxu0 0.0
        %1923 = vmatprep.subr.mxu0 0.0
        %1924 = vmatpush1.msra.mxu0 0.0
        %1925 = vmatprep.subr.mxu0 0.0
        %1926 = vmatpush1.msra.mxu0 0.0
        %1927 = vmatprep.subr.mxu0 0.0
        %1928 = vmatpush1.msra.mxu0 0.0
        %1929 = vmatprep.subr.mxu0 0.0
        %1930 = vmatpush1.msra.mxu0 0.0
        %1931 = vmatprep.subr.mxu0 %v1899
        %1932 = vmatpush1.msra.mxu0 %v1898
        %1933 = vmatprep.subr.mxu0 %v1897
        %1934 = vmatpush1.msra.mxu0 %v1896
        %1935 = vmatprep.subr.mxu0 %v1895
        %1936 = vmatpush1.msra.mxu0 %v1894
        %1937 = vmatprep.subr.mxu0 %v1893
        %1938 = vmatpush1.msra.mxu0 %v1892
        %1939 = vmatprep.subr.mxu0 %v1891
        %1940 = vmatpush1.msra.mxu0 %v1890
        %1941 = vmatprep.subr.mxu0 %v1889
        %1942 = vmatpush1.msra.mxu0 %v1888
        %1943 = vmatprep.subr.mxu0 %v1887
        %1944 = vmatpush1.msra.mxu0 %v1886
        %1945 = vmatprep.subr.mxu0 %v1885
        %1946 = vmatpush1.msra.mxu0 %v1884
        %1947 = vmatprep.subr.mxu0 0.0
        %1948 = vmatpush2.msra.mxu0 0.0
        %1949 = vmatprep.subr.mxu0 0.0
        %1950 = vmatpush2.msra.mxu0 0.0
        %1951 = vmatprep.subr.mxu0 0.0
        %1952 = vmatpush2.msra.mxu0 0.0
        %1953 = vmatprep.subr.mxu0 0.0
        %1954 = vmatpush2.msra.mxu0 0.0
        %1955 = vmatprep.subr.mxu0 0.0
        %1956 = vmatpush2.msra.mxu0 0.0
        %1957 = vmatprep.subr.mxu0 0.0
        %1958 = vmatpush2.msra.mxu0 0.0
        %1959 = vmatprep.subr.mxu0 0.0
        %1960 = vmatpush2.msra.mxu0 0.0
        %1961 = vmatprep.subr.mxu0 0.0
        %1962 = vmatpush2.msra.mxu0 0.0
        %1963 = vmatprep.subr.mxu0 0.0
        %1964 = vmatpush2.msra.mxu0 0.0
        %1965 = vmatprep.subr.mxu0 0.0
        %1966 = vmatpush2.msra.mxu0 0.0
        %1967 = vmatprep.subr.mxu0 0.0
        %1968 = vmatpush2.msra.mxu0 0.0
        %1969 = vmatprep.subr.mxu0 0.0
        %1970 = vmatpush2.msra.mxu0 0.0
        %1971 = vmatprep.subr.mxu0 0.0
        %1972 = vmatpush2.msra.mxu0 0.0
        %1973 = vmatprep.subr.mxu0 0.0
        %1974 = vmatpush2.msra.mxu0 0.0
        %1975 = vmatprep.subr.mxu0 0.0
        %1976 = vmatpush2.msra.mxu0 0.0
        %1977 = vmatprep.subr.mxu0 0.0
        %1978 = vmatpush2.msra.mxu0 0.0
        %1979 = vmatprep.mubr.f32.mxu0 0.0
        %1980 = vmatmul.mubr.f32.gmra.mxu0 %v1913
        %v1981 = vpop.f32.mrf.mxu0
        %v1982 = vadd.f32 %v1905, %v1981
        %v1983 = vpop.f32.mrf.mxu0
        %v1984 = vadd.f32 %v1909, %v1983
        %1985 = vdwg.mxu0
        %v1986 = vmax.f32 %v1982, 0.0
        %v1987 = vmax.f32 %v1984, 0.0
        %v1988 = vld [vmem:[%s10] sm:$0xff]
        %v1989 = vld [vmem:[%s10 + $0x8] sm:$0xff]
        %v1990 = vld [vmem:[%s10 + $0x10] sm:$0xff]
        %v1991 = vld [vmem:[%s10 + $0x18] sm:$0xff]
        %v1992 = vld [vmem:[%s10 + $0x20] sm:$0xff]
        %v1993 = vld [vmem:[%s10 + $0x28] sm:$0xff]
        %v1994 = vld [vmem:[%s10 + $0x30] sm:$0xff]
        %v1995 = vld [vmem:[%s10 + $0x38] sm:$0xff]
        %v1996 = vld [vmem:[%s10 + $0x40] sm:$0xff]
        %v1997 = vld [vmem:[%s10 + $0x48] sm:$0xff]
        %v1998 = vld [vmem:[%s10 + $0x50] sm:$0xff]
        %v1999 = vld [vmem:[%s10 + $0x58] sm:$0xff]
        %v2000 = vld [vmem:[%s10 + $0x60] sm:$0xff]
        %v2001 = vld [vmem:[%s10 + $0x68] sm:$0xff]
        %v2002 = vld [vmem:[%s10 + $0x70] sm:$0xff]
        %v2003 = vld [vmem:[%s10 + $0x78] sm:$0xff]
        %v2004 = vld [vmem:[%s10 + $0x80] sm:$0xff]
        %v2005 = vld [vmem:[%s10 + $0x88] sm:$0xff]
        %v2006 = vld [vmem:[%s10 + $0x90] sm:$0xff]
        %v2007 = vld [vmem:[%s10 + $0x98] sm:$0xff]
        %v2008 = vld [vmem:[%s10 + $0xa0] sm:$0xff]
        %v2009 = vld [vmem:[%s10 + $0xa8] sm:$0xff]
        %v2010 = vld [vmem:[%s10 + $0xb0] sm:$0xff]
        %v2011 = vld [vmem:[%s10 + $0xb8] sm:$0xff]
        %v2012 = vld [vmem:[%s10 + $0xc0] sm:$0xff]
        %v2013 = vld [vmem:[%s10 + $0xc8] sm:$0xff]
        %v2014 = vld [vmem:[%s10 + $0xd0] sm:$0xff]
        %v2015 = vld [vmem:[%s10 + $0xd8] sm:$0xff]
        %v2016 = vld [vmem:[%s10 + $0xe0] sm:$0xff]
        %v2017 = vld [vmem:[%s10 + $0xe8] sm:$0xff]
        %v2018 = vld [vmem:[%s10 + $0xf0] sm:$0xff]
        %v2019 = vld [vmem:[%s10 + $0xf8] sm:$0xff]
        %v2020 = vld [vmem:[%s11] sm:$0x1]
        %v2022 = vlaneseq
        %v2023 = vshrl.u32 %v2022, 7
        %v2024 = vsub.s32 0, %v2023
        %v2025 = vrot.slane %v2020, %v2024
        %2027 = vmatprep.subr.mxu0 0.0
        %2028 = vmatpush1.msra.mxu0 %v2003
        %2029 = vmatprep.subr.mxu0 0.0
        %2030 = vmatpush1.msra.mxu0 %v2002
        %2031 = vmatprep.subr.mxu0 0.0
        %2032 = vmatpush1.msra.mxu0 %v2001
        %2033 = vmatprep.subr.mxu0 0.0
        %2034 = vmatpush1.msra.mxu0 %v2000
        %2035 = vmatprep.subr.mxu0 0.0
        %2036 = vmatpush1.msra.mxu0 %v1999
        %2037 = vmatprep.subr.mxu0 0.0
        %2038 = vmatpush1.msra.mxu0 %v1998
        %2039 = vmatprep.subr.mxu0 0.0
        %2040 = vmatpush1.msra.mxu0 %v1997
        %2041 = vmatprep.subr.mxu0 0.0
        %2042 = vmatpush1.msra.mxu0 %v1996
        %2043 = vmatprep.subr.mxu0 0.0
        %2044 = vmatpush1.msra.mxu0 %v1995
        %2045 = vmatprep.subr.mxu0 0.0
        %2046 = vmatpush1.msra.mxu0 %v1994
        %2047 = vmatprep.subr.mxu0 0.0
        %2048 = vmatpush1.msra.mxu0 %v1993
        %2049 = vmatprep.subr.mxu0 0.0
        %2050 = vmatpush1.msra.mxu0 %v1992
        %2051 = vmatprep.subr.mxu0 0.0
        %2052 = vmatpush1.msra.mxu0 %v1991
        %2053 = vmatprep.subr.mxu0 0.0
        %2054 = vmatpush1.msra.mxu0 %v1990
        %2055 = vmatprep.subr.mxu0 0.0
        %2056 = vmatpush1.msra.mxu0 %v1989
        %2057 = vmatprep.subr.mxu0 0.0
        %2058 = vmatpush1.msra.mxu0 %v1988
        %2059 = vmatprep.subr.mxu0 0.0
        %2060 = vmatpush2.msra.mxu0 %v2019
        %2061 = vmatprep.subr.mxu0 0.0
        %2062 = vmatpush2.msra.mxu0 %v2018
        %2063 = vmatprep.subr.mxu0 0.0
        %2064 = vmatpush2.msra.mxu0 %v2017
        %2065 = vmatprep.subr.mxu0 0.0
        %2066 = vmatpush2.msra.mxu0 %v2016
        %2067 = vmatprep.subr.mxu0 0.0
        %2068 = vmatpush2.msra.mxu0 %v2015
        %2069 = vmatprep.subr.mxu0 0.0
        %2070 = vmatpush2.msra.mxu0 %v2014
        %2071 = vmatprep.subr.mxu0 0.0
        %2072 = vmatpush2.msra.mxu0 %v2013
        %2073 = vmatprep.subr.mxu0 0.0
        %2074 = vmatpush2.msra.mxu0 %v2012
        %2075 = vmatprep.subr.mxu0 0.0
        %2076 = vmatpush2.msra.mxu0 %v2011
        %2077 = vmatprep.subr.mxu0 0.0
        %2078 = vmatpush2.msra.mxu0 %v2010
        %2079 = vmatprep.subr.mxu0 0.0
        %2080 = vmatpush2.msra.mxu0 %v2009
        %2081 = vmatprep.subr.mxu0 0.0
        %2082 = vmatpush2.msra.mxu0 %v2008
        %2083 = vmatprep.subr.mxu0 0.0
        %2084 = vmatpush2.msra.mxu0 %v2007
        %2085 = vmatprep.subr.mxu0 0.0
        %2086 = vmatpush2.msra.mxu0 %v2006
        %2087 = vmatprep.subr.mxu0 0.0
        %2088 = vmatpush2.msra.mxu0 %v2005
        %2089 = vmatprep.subr.mxu0 0.0
        %2090 = vmatpush2.msra.mxu0 %v2004
        %2091 = vmatprep.mubr.f32.mxu0 %v1987
        %2092 = vmatmul.mubr.f32.gmra.mxu0 %v1986
        %v2093 = vpop.f32.mrf.mxu0
        %v2094 = vadd.f32 %v2025, %v2093
        %v2095 = vpop.f32.mrf.mxu0
        %2096 = vdwg.mxu0
        %v2097 = vadd.f32 %v1854, %v2094
        %2098 = vst.msk [vmem:[%s404] sm:$0xff] %vm412, %v2097
        %s2099 = sand.u32 %s291, 1
        %s2100 = scalar_lea.sflag [#allocation3], %s2099
        %s2101 = sand.u32 %s291, 1
        %s2102 = smul.addr %s2101, 8
        %s2103 = scalar_lea.vmem [#allocation2], %s2102
        // Predicated region
        $region69: #{tpu_custom_call.1} parent=67 // pred_check
          %p2104 = pneg %p301
        $region70: #{tpu_custom_call.1} parent=67 // pred_check_branch
          %2106 = sbr.rel (%p2104) target = $region72
        $region71: #{tpu_custom_call.1} parent=67 // pred_region
          %s2108 = ssub.s32 128, 128
          %2109 = vsyncadd %s2100, %s2108
          %s2110 = smul.addr %s26, 128
          %s2111 = scalar_lea.hbm %s12, %s2110
          %s2113 = sshll.u32 %s2103, 4
          %s2114 = int_to_ptr.vmem [resolvable:$true] %s2113
          %2116 = dma.vmem_to_hbm [thread:$0]  %s2114, 128, %s2111, %s2100
        $region72: #{tpu_custom_call.1} parent=67 // pred_fallthru
          _
      $region68: #{tpu_custom_call.1} parent=5 // pred_fallthru
        _
      %p2117 = scmp.le.s32.totalorder 2, %s21
      // Predicated region
      $region73: #{tpu_custom_call.1} parent=5 // pred_check
        %p2118 = pneg %p2117
      $region74: #{tpu_custom_call.1} parent=5 // pred_check_branch
        %2120 = sbr.rel (%p2118) target = $region76
      $region75: #{tpu_custom_call.1} parent=5 // pred_region
        %s2121 = ssub.s32 %s21, 2
        // Predicated region
        $region77: #{tpu_custom_call.1} parent=75 // pred_check
          %p2122 = pneg %p307
        $region78: #{tpu_custom_call.1} parent=75 // pred_check_branch
          %2124 = sbr.rel (%p2122) target = $region80
        $region79: #{tpu_custom_call.1} parent=75 // pred_region
          %s2125 = sand.u32 %s292, 1
          %s2126 = scalar_lea.sflag [#allocation3], %s2125
          %s2127 = sand.u32 %s292, 1
          %s2128 = smul.addr %s2127, 8
          %s2129 = scalar_lea.vmem [#allocation2], %s2128
          %2130 = dma.done %s2126, 128
        $region80: #{tpu_custom_call.1} parent=75 // pred_fallthru
          _
      $region76: #{tpu_custom_call.1} parent=5 // pred_fallthru
        _
    $region6: #{tpu_custom_call.1} parent=1 // loop_footer
      %s25 = sadd.s32 1, %s21
    $region7: #{tpu_custom_call.1} parent=1 // loop_footer_branch
      %20 = sbr.rel target = $region3
    $region8: #{tpu_custom_call.1} parent=1 // loop_exit
      _
    %2131 = vsyncpa [#allocation3], 1
    %s2132 = scalar_lea.sflag [#allocation3], 1
    %2133 = vsyncpa %s2132, 1

</llo_original>
